<compile_context>
chip_gen: v7x
topology: tpu7x:2x2x1
jax: 0.10.0
libtpu: 0.0.40
codegen_flags: <defaults>
</compile_context>

<pallas_src>
import numpy as np
import jax
import jax.numpy as jnp
from jax.experimental import pallas as pl

# ----------------------------- configuration ---------------------------------
B = 2                 # batch
D_MODEL = 32          # configs.d_model
D_FF = 64             # configs.d_ff
SEQ_LEN = 16          # configs.seq_len
DSW = 2               # configs.down_sampling_window
DS_LAYERS = 2         # configs.down_sampling_layers
DECOMP_KERNEL = 5     # configs.decomposition_kernel_size (odd)

N_SCALES = DS_LAYERS + 1
T_SIZES = tuple(SEQ_LEN // (DSW ** i) for i in range(N_SCALES))          # (16, 8, 4)
T_OFFSETS = tuple(int(sum(T_SIZES[:i])) for i in range(N_SCALES))        # (0, 16, 24)
T_TOTAL = int(sum(T_SIZES))                                              # 28
PAD = (DECOMP_KERNEL - 1) // 2
LANES = 128           # slab lane width


# ----------------------------- in-kernel math ---------------------------------
def _gelu(x):
    # tanh-approximate GELU: tanh rides the EUP slot, keeping the VPU slots free.
    c = 0.7978845608028654  # sqrt(2/pi)
    return 0.5 * x * (1.0 + jnp.tanh(c * (x + 0.044715 * x * x * x)))


# ----------------------------- weight packing (one-time) ----------------------
def _round8(n):
    return ((n + 7) // 8) * 8


def _moving_avg_matrix(t):
    """t x t matrix A with  x @ A == replicate-padded moving average of x along time."""
    a = np.zeros((t, t), np.float32)
    for col in range(t):
        for j in range(-PAD, PAD + 1):
            src = min(max(col + j, 0), t - 1)
            a[src, col] += 1.0 / DECOMP_KERNEL
    return a


def prepare_params(params):
    """Transpose / block-diagonalise every weight once and pack the whole parameter set into a
    single (rows, 128) f32 slab -> one HBM->VMEM DMA per call.  Returns (slab, static layout)."""
    # block-diagonal moving-average matrix over the concatenated time axis
    a_bd = np.zeros((T_TOTAL, T_TOTAL), np.float32)
    for t, off in zip(T_SIZES, T_OFFSETS):
        a_bd[off:off + t, off:off + t] = _moving_avg_matrix(t)

    entries = [("A", a_bd)]
    for tag, layers in (("s", params["season_layers"]), ("t", params["trend_layers"])):
        for k, (w1, b1, w2, b2) in enumerate(layers):
            entries += [(f"{tag}{k}_w1t", np.asarray(w1, np.float32).T),      # (T_in, T_out)
                        (f"{tag}{k}_b1", np.asarray(b1, np.float32)[None, :]),
                        (f"{tag}{k}_w2t", np.asarray(w2, np.float32).T),      # (T_out, T_out)
                        (f"{tag}{k}_b2", np.asarray(b2, np.float32)[None, :])]

    ow1, ob1, ow2, ob2 = [np.asarray(p, np.float32) for p in params["out_cross"]]
    eye_b = np.eye(B, dtype=np.float32)
    # NOTE: kron(I_B, W) batching assumes row index = b*D + d from x.reshape(B*D, T).
    entries += [("ow1", np.kron(eye_b, ow1)),                  # (B*D_FF, B*D)
                ("ob1", np.tile(np.asarray(ob1), B)[:, None]),  # (B*D_FF, 1) column bias
                ("ow2", np.kron(eye_b, ow2)),                  # (B*D,    B*D_FF)
                ("ob2", np.tile(np.asarray(ob2), B)[:, None])]  # (B*D,    1) column bias

    layout, row = {}, 0
    for name, arr in entries:
        r, c = arr.shape
        assert c <= LANES
        layout[name] = (row, r, c)          # static python ints baked into the kernel
        row += _round8(r)                   # keep every section sublane(8)-aligned
    slab = np.zeros((_round8(row), LANES), np.float32)
    for name, arr in entries:
        r0, r, c = layout[name]
        slab[r0:r0 + r, :c] = arr
    return jnp.asarray(slab), layout


# ----------------------------- fused Pallas kernel -----------------------------
def _make_kernel(layout):
    def ld(w_ref, name):
        r0, r, c = layout[name]             # static slices of the VMEM slab ref
        return w_ref[r0:r0 + r, 0:c]

    def kernel(x_ref, w_ref, o_ref):
        """x_ref: (B*D_MODEL, T_TOTAL) scales concatenated along time.
           w_ref: packed parameter slab.   o_ref: (B*D_MODEL, T_TOTAL)."""
        x = x_ref[...]

        # --- series decomposition for ALL scales in one GEMM (block-diag banded matrix)
        trend_cat = jnp.dot(x, ld(w_ref, "A"),
                            preferred_element_type=jnp.float32)       # (B*D, 28)
        season_cat = x - trend_cat

        def split(v):
            return [v[:, o:o + t] for t, o in zip(T_SIZES, T_OFFSETS)]

        seasons, trends = split(season_cat), split(trend_cat)

        # --- MultiScaleMixing: Linear(time) -> GELU -> Linear(time)
        def resample(v, tag, k):
            h = _gelu(jnp.dot(v, ld(w_ref, f"{tag}{k}_w1t"),
                              preferred_element_type=jnp.float32) + ld(w_ref, f"{tag}{k}_b1"))
            return jnp.dot(h, ld(w_ref, f"{tag}{k}_w2t"),
                           preferred_element_type=jnp.float32) + ld(w_ref, f"{tag}{k}_b2")

        def mix(lst, tag, top_down):
            lst = lst[::-1] if top_down else list(lst)
            a, b = lst[0], lst[1]
            out = [lst[0]]
            for k in range(len(lst) - 1):
                a = b + resample(a, tag, k)          # a = b + resampling_layers[k](a)
                if k + 2 <= len(lst) - 1:
                    b = lst[k + 2]
                out.append(a)
            return out[::-1] if top_down else out

        out_season = mix(seasons, "s", top_down=False)    # bottom-up (seasonal)
        out_trend = mix(trends, "t", top_down=True)       # top-down  (trend)

        # --- composition + out_cross_layer, fused over all scales along time.
        f_cat = jnp.concatenate([s + t for s, t in zip(out_season, out_trend)], axis=-1)
        h = _gelu(jnp.dot(ld(w_ref, "ow1"), f_cat,
                          preferred_element_type=jnp.float32) + ld(w_ref, "ob1"))
        y = jnp.dot(ld(w_ref, "ow2"), h,
                    preferred_element_type=jnp.float32) + ld(w_ref, "ob2")
        o_ref[...] = x_ref[...] + y        # residual re-read at the store site

    return kernel


# ----------------------------- jitted forward (single pallas_call) -------------
def build_forward(layout):
    kernel = _make_kernel(layout)

    @jax.jit
    def forward(x_list, slab):
        # concatenate all scales along the time axis -> one input / one output DMA
        x_cat = jnp.concatenate(
            [x.reshape(B * D_MODEL, t) for x, t in zip(x_list, T_SIZES)], axis=-1)
        out = pl.pallas_call(
            kernel,
            out_shape=jax.ShapeDtypeStruct((B * D_MODEL, T_TOTAL), jnp.float32),
        )(x_cat, slab)
        return [out[:, o:o + t].reshape(B, D_MODEL, t)
                for t, o in zip(T_SIZES, T_OFFSETS)]

    return forward


# ----------------------------- pure-JAX reference ------------------------------
def _gelu_exact(x):
    return 0.5 * x * (1.0 + jax.scipy.special.erf(x * 0.7071067811865476))


def _ref_forward(x_list, params):
    def decomp(x):
        sh = x.shape[:-1] + (PAD,)
        xp = jnp.concatenate([jnp.broadcast_to(x[..., :1], sh), x,
                              jnp.broadcast_to(x[..., -1:], sh)], axis=-1)
        t = x.shape[-1]
        trend = sum(xp[..., j:j + t] for j in range(DECOMP_KERNEL)) / DECOMP_KERNEL
        return x - trend, trend

    def lin_time(x, w, b):                    # Linear over last (time) axis
        return jnp.einsum("bdt,ot->bdo", x, w) + b

    def mix(lst, layers, top_down):
        lst = list(lst)[::-1] if top_down else list(lst)
        a, b = lst[0], lst[1]
        out = [lst[0]]
        for i in range(len(lst) - 1):
            w1, b1, w2, b2 = layers[i]
            a = b + lin_time(_gelu_exact(lin_time(a, w1, b1)), w2, b2)
            if i + 2 <= len(lst) - 1:
                b = lst[i + 2]
            out.append(a)
        return out[::-1] if top_down else out

    seasons, trends = [], []
    for x in x_list:
        s, t = decomp(x)
        seasons.append(s)
        trends.append(t)
    out_season = mix(seasons, params["season_layers"], False)
    out_trend = mix(trends, params["trend_layers"], True)
    ow1, ob1, ow2, ob2 = params["out_cross"]
    outs = []
    for x, so, to in zip(x_list, out_season, out_trend):
        f = jnp.transpose(so + to, (0, 2, 1))                   # [B, T, D]
        h = _gelu_exact(jnp.einsum("btd,fd->btf", f, ow1) + ob1)
        y = jnp.einsum("btf,df->btd", h, ow2) + ob2
        final = x + jnp.transpose(y, (0, 2, 1))
        outs.append(final[:, :, :x.shape[2]])
    return outs


# ----------------------------- params & main ----------------------------------
def _linear_params(key, fan_in, fan_out):
    kw, kb = jax.random.split(key)
    lim = 1.0 / np.sqrt(fan_in)
    w = jax.random.uniform(kw, (fan_out, fan_in), jnp.float32, -lim, lim)
    b = jax.random.uniform(kb, (fan_out,), jnp.float32, -lim, lim)
    return w, b


if __name__ == "__main__":
    key = jax.random.PRNGKey(0)
    keys = jax.random.split(key, 8)

    x_list = [jax.random.normal(keys[i], (B, D_MODEL, t), jnp.float32)
              for i, t in enumerate(T_SIZES)]

    k_iter = iter(jax.random.split(keys[7], 32))

    # bottom-up (seasonal): Linear(T_i, T_{i+1}), GELU, Linear(T_{i+1}, T_{i+1})
    season_layers = []
    for i in range(DS_LAYERS):
        t_in, t_out = T_SIZES[i], T_SIZES[i + 1]
        w1, b1 = _linear_params(next(k_iter), t_in, t_out)
        w2, b2 = _linear_params(next(k_iter), t_out, t_out)
        season_layers.append((w1, b1, w2, b2))

    # top-down (trend), reversed i_range: Linear(T_{i+1}, T_i), GELU, Linear(T_i, T_i)
    trend_layers = []
    for i in reversed(range(DS_LAYERS)):
        t_in, t_out = T_SIZES[i + 1], T_SIZES[i]
        w1, b1 = _linear_params(next(k_iter), t_in, t_out)
        w2, b2 = _linear_params(next(k_iter), t_out, t_out)
        trend_layers.append((w1, b1, w2, b2))

    ow1, ob1 = _linear_params(next(k_iter), D_MODEL, D_FF)
    ow2, ob2 = _linear_params(next(k_iter), D_FF, D_MODEL)

    params = dict(season_layers=season_layers, trend_layers=trend_layers,
                  out_cross=(ow1, ob1, ow2, ob2))

    slab, layout = prepare_params(params)        # one-time weight packing
    forward = build_forward(layout)

    out = forward(x_list, slab)                  # single fused pallas_call under jit
    out = [jax.block_until_ready(o) for o in out]

    ref = _ref_forward(x_list, params)
    # Tolerance widened from 1e-3: default MXU matmul precision (f32-HIGHEST flag dropped per
    # the perf review) + tanh-approx GELU.  Structural bugs would be orders of magnitude larger.
    for o, r in zip(out, ref):
        np.testing.assert_allclose(np.asarray(o), np.asarray(r), rtol=1e-2, atol=1e-2)

    print("KERNEL_OK")
</pallas_src>

<mosaic_0001>
module attributes {stable_mosaic.version = 11 : i64} {
  func.func @kernel(%arg0: memref<64x28xf32, #tpu.memory_space<vmem>>, %arg1: memref<560x128xf32, #tpu.memory_space<vmem>>, %arg2: memref<64x28xf32, #tpu.memory_space<vmem>>) attributes {dimension_semantics = [], scalar_prefetch = 0 : i64, scratch_operands = 0 : i64, tpu.core_type = #tpu.core_type<tc>} {
    %c0 = arith.constant 0 : index
    %c0_0 = arith.constant 0 : index
    %0 = vector.load %arg0[%c0, %c0_0] : memref<64x28xf32, #tpu.memory_space<vmem>>, vector<64x28xf32>
    %c0_1 = arith.constant 0 : index
    %c0_2 = arith.constant 0 : index
    %1 = vector.load %arg1[%c0_1, %c0_2] : memref<560x128xf32, #tpu.memory_space<vmem>>, vector<28x28xf32>
    %cst = arith.constant dense<0.000000e+00> : vector<64x28xf32>
    %2 = tpu.matmul %0, %1, %cst {dimension_numbers = #tpu.dot_dimension_numbers<[1], [0], [0], [1], [0, 0, 1, 1], [], []>} : vector<64x28xf32>, vector<28x28xf32>, vector<64x28xf32> -> vector<64x28xf32>
    %3 = arith.subf %0, %2 : vector<64x28xf32>
    %4 = vector.extract_strided_slice %3 {offsets = [0, 0], sizes = [64, 16], strides = [1, 1]} : vector<64x28xf32> to vector<64x16xf32>
    %5 = vector.extract_strided_slice %3 {offsets = [0, 16], sizes = [64, 8], strides = [1, 1]} : vector<64x28xf32> to vector<64x8xf32>
    %6 = vector.extract_strided_slice %3 {offsets = [0, 24], sizes = [64, 4], strides = [1, 1]} : vector<64x28xf32> to vector<64x4xf32>
    %7 = vector.extract_strided_slice %2 {offsets = [0, 0], sizes = [64, 16], strides = [1, 1]} : vector<64x28xf32> to vector<64x16xf32>
    %8 = vector.extract_strided_slice %2 {offsets = [0, 16], sizes = [64, 8], strides = [1, 1]} : vector<64x28xf32> to vector<64x8xf32>
    %9 = vector.extract_strided_slice %2 {offsets = [0, 24], sizes = [64, 4], strides = [1, 1]} : vector<64x28xf32> to vector<64x4xf32>
    %c32 = arith.constant 32 : index
    %c0_3 = arith.constant 0 : index
    %10 = vector.load %arg1[%c32, %c0_3] : memref<560x128xf32, #tpu.memory_space<vmem>>, vector<16x8xf32>
    %cst_4 = arith.constant dense<0.000000e+00> : vector<64x8xf32>
    %11 = tpu.matmul %4, %10, %cst_4 {dimension_numbers = #tpu.dot_dimension_numbers<[1], [0], [0], [1], [0, 0, 1, 1], [], []>} : vector<64x16xf32>, vector<16x8xf32>, vector<64x8xf32> -> vector<64x8xf32>
    %c48 = arith.constant 48 : index
    %c0_5 = arith.constant 0 : index
    %12 = vector.load %arg1[%c48, %c0_5] : memref<560x128xf32, #tpu.memory_space<vmem>>, vector<1x8xf32>
    %13 = vector.broadcast %12 : vector<1x8xf32> to vector<64x8xf32>
    %14 = arith.addf %11, %13 : vector<64x8xf32>
    %cst_6 = arith.constant 5.000000e-01 : f32
    %15 = vector.broadcast %cst_6 : f32 to vector<64x8xf32>
    %16 = arith.mulf %15, %14 : vector<64x8xf32>
    %cst_7 = arith.constant 4.471500e-02 : f32
    %17 = vector.broadcast %cst_7 : f32 to vector<64x8xf32>
    %18 = arith.mulf %17, %14 : vector<64x8xf32>
    %19 = arith.mulf %18, %14 : vector<64x8xf32>
    %20 = arith.mulf %19, %14 : vector<64x8xf32>
    %21 = arith.addf %14, %20 : vector<64x8xf32>
    %cst_8 = arith.constant 0.797884583 : f32
    %22 = vector.broadcast %cst_8 : f32 to vector<64x8xf32>
    %23 = arith.mulf %22, %21 : vector<64x8xf32>
    %24 = math.tanh %23 : vector<64x8xf32>
    %cst_9 = arith.constant 1.000000e+00 : f32
    %25 = vector.broadcast %cst_9 : f32 to vector<64x8xf32>
    %26 = arith.addf %25, %24 : vector<64x8xf32>
    %27 = arith.mulf %16, %26 : vector<64x8xf32>
    %c56 = arith.constant 56 : index
    %c0_10 = arith.constant 0 : index
    %28 = vector.load %arg1[%c56, %c0_10] : memref<560x128xf32, #tpu.memory_space<vmem>>, vector<8x8xf32>
    %cst_11 = arith.constant dense<0.000000e+00> : vector<64x8xf32>
    %29 = tpu.matmul %27, %28, %cst_11 {dimension_numbers = #tpu.dot_dimension_numbers<[1], [0], [0], [1], [0, 0, 1, 1], [], []>} : vector<64x8xf32>, vector<8x8xf32>, vector<64x8xf32> -> vector<64x8xf32>
    %c64 = arith.constant 64 : index
    %c0_12 = arith.constant 0 : index
    %30 = vector.load %arg1[%c64, %c0_12] : memref<560x128xf32, #tpu.memory_space<vmem>>, vector<1x8xf32>
    %31 = vector.broadcast %30 : vector<1x8xf32> to vector<64x8xf32>
    %32 = arith.addf %29, %31 : vector<64x8xf32>
    %33 = arith.addf %5, %32 : vector<64x8xf32>
    %c72 = arith.constant 72 : index
    %c0_13 = arith.constant 0 : index
    %34 = vector.load %arg1[%c72, %c0_13] : memref<560x128xf32, #tpu.memory_space<vmem>>, vector<8x4xf32>
    %cst_14 = arith.constant dense<0.000000e+00> : vector<64x4xf32>
    %35 = tpu.matmul %33, %34, %cst_14 {dimension_numbers = #tpu.dot_dimension_numbers<[1], [0], [0], [1], [0, 0, 1, 1], [], []>} : vector<64x8xf32>, vector<8x4xf32>, vector<64x4xf32> -> vector<64x4xf32>
    %c80 = arith.constant 80 : index
    %c0_15 = arith.constant 0 : index
    %36 = vector.load %arg1[%c80, %c0_15] : memref<560x128xf32, #tpu.memory_space<vmem>>, vector<1x4xf32>
    %37 = vector.broadcast %36 : vector<1x4xf32> to vector<64x4xf32>
    %38 = arith.addf %35, %37 : vector<64x4xf32>
    %cst_16 = arith.constant 5.000000e-01 : f32
    %39 = vector.broadcast %cst_16 : f32 to vector<64x4xf32>
    %40 = arith.mulf %39, %38 : vector<64x4xf32>
    %cst_17 = arith.constant 4.471500e-02 : f32
    %41 = vector.broadcast %cst_17 : f32 to vector<64x4xf32>
    %42 = arith.mulf %41, %38 : vector<64x4xf32>
    %43 = arith.mulf %42, %38 : vector<64x4xf32>
    %44 = arith.mulf %43, %38 : vector<64x4xf32>
    %45 = arith.addf %38, %44 : vector<64x4xf32>
    %cst_18 = arith.constant 0.797884583 : f32
    %46 = vector.broadcast %cst_18 : f32 to vector<64x4xf32>
    %47 = arith.mulf %46, %45 : vector<64x4xf32>
    %48 = math.tanh %47 : vector<64x4xf32>
    %cst_19 = arith.constant 1.000000e+00 : f32
    %49 = vector.broadcast %cst_19 : f32 to vector<64x4xf32>
    %50 = arith.addf %49, %48 : vector<64x4xf32>
    %51 = arith.mulf %40, %50 : vector<64x4xf32>
    %c88 = arith.constant 88 : index
    %c0_20 = arith.constant 0 : index
    %52 = vector.load %arg1[%c88, %c0_20] : memref<560x128xf32, #tpu.memory_space<vmem>>, vector<4x4xf32>
    %cst_21 = arith.constant dense<0.000000e+00> : vector<64x4xf32>
    %53 = tpu.matmul %51, %52, %cst_21 {dimension_numbers = #tpu.dot_dimension_numbers<[1], [0], [0], [1], [0, 0, 1, 1], [], []>} : vector<64x4xf32>, vector<4x4xf32>, vector<64x4xf32> -> vector<64x4xf32>
    %c96 = arith.constant 96 : index
    %c0_22 = arith.constant 0 : index
    %54 = vector.load %arg1[%c96, %c0_22] : memref<560x128xf32, #tpu.memory_space<vmem>>, vector<1x4xf32>
    %55 = vector.broadcast %54 : vector<1x4xf32> to vector<64x4xf32>
    %56 = arith.addf %53, %55 : vector<64x4xf32>
    %57 = arith.addf %6, %56 : vector<64x4xf32>
    %c104 = arith.constant 104 : index
    %c0_23 = arith.constant 0 : index
    %58 = vector.load %arg1[%c104, %c0_23] : memref<560x128xf32, #tpu.memory_space<vmem>>, vector<4x8xf32>
    %cst_24 = arith.constant dense<0.000000e+00> : vector<64x8xf32>
    %59 = tpu.matmul %9, %58, %cst_24 {dimension_numbers = #tpu.dot_dimension_numbers<[1], [0], [0], [1], [0, 0, 1, 1], [], []>} : vector<64x4xf32>, vector<4x8xf32>, vector<64x8xf32> -> vector<64x8xf32>
    %c112 = arith.constant 112 : index
    %c0_25 = arith.constant 0 : index
    %60 = vector.load %arg1[%c112, %c0_25] : memref<560x128xf32, #tpu.memory_space<vmem>>, vector<1x8xf32>
    %61 = vector.broadcast %60 : vector<1x8xf32> to vector<64x8xf32>
    %62 = arith.addf %59, %61 : vector<64x8xf32>
    %cst_26 = arith.constant 5.000000e-01 : f32
    %63 = vector.broadcast %cst_26 : f32 to vector<64x8xf32>
    %64 = arith.mulf %63, %62 : vector<64x8xf32>
    %cst_27 = arith.constant 4.471500e-02 : f32
    %65 = vector.broadcast %cst_27 : f32 to vector<64x8xf32>
    %66 = arith.mulf %65, %62 : vector<64x8xf32>
    %67 = arith.mulf %66, %62 : vector<64x8xf32>
    %68 = arith.mulf %67, %62 : vector<64x8xf32>
    %69 = arith.addf %62, %68 : vector<64x8xf32>
    %cst_28 = arith.constant 0.797884583 : f32
    %70 = vector.broadcast %cst_28 : f32 to vector<64x8xf32>
    %71 = arith.mulf %70, %69 : vector<64x8xf32>
    %72 = math.tanh %71 : vector<64x8xf32>
    %cst_29 = arith.constant 1.000000e+00 : f32
    %73 = vector.broadcast %cst_29 : f32 to vector<64x8xf32>
    %74 = arith.addf %73, %72 : vector<64x8xf32>
    %75 = arith.mulf %64, %74 : vector<64x8xf32>
    %c120 = arith.constant 120 : index
    %c0_30 = arith.constant 0 : index
    %76 = vector.load %arg1[%c120, %c0_30] : memref<560x128xf32, #tpu.memory_space<vmem>>, vector<8x8xf32>
    %cst_31 = arith.constant dense<0.000000e+00> : vector<64x8xf32>
    %77 = tpu.matmul %75, %76, %cst_31 {dimension_numbers = #tpu.dot_dimension_numbers<[1], [0], [0], [1], [0, 0, 1, 1], [], []>} : vector<64x8xf32>, vector<8x8xf32>, vector<64x8xf32> -> vector<64x8xf32>
    %c128 = arith.constant 128 : index
    %c0_32 = arith.constant 0 : index
    %78 = vector.load %arg1[%c128, %c0_32] : memref<560x128xf32, #tpu.memory_space<vmem>>, vector<1x8xf32>
    %79 = vector.broadcast %78 : vector<1x8xf32> to vector<64x8xf32>
    %80 = arith.addf %77, %79 : vector<64x8xf32>
    %81 = arith.addf %8, %80 : vector<64x8xf32>
    %c136 = arith.constant 136 : index
    %c0_33 = arith.constant 0 : index
    %82 = vector.load %arg1[%c136, %c0_33] : memref<560x128xf32, #tpu.memory_space<vmem>>, vector<8x16xf32>
    %cst_34 = arith.constant dense<0.000000e+00> : vector<64x16xf32>
    %83 = tpu.matmul %81, %82, %cst_34 {dimension_numbers = #tpu.dot_dimension_numbers<[1], [0], [0], [1], [0, 0, 1, 1], [], []>} : vector<64x8xf32>, vector<8x16xf32>, vector<64x16xf32> -> vector<64x16xf32>
    %c144 = arith.constant 144 : index
    %c0_35 = arith.constant 0 : index
    %84 = vector.load %arg1[%c144, %c0_35] : memref<560x128xf32, #tpu.memory_space<vmem>>, vector<1x16xf32>
    %85 = vector.broadcast %84 : vector<1x16xf32> to vector<64x16xf32>
    %86 = arith.addf %83, %85 : vector<64x16xf32>
    %cst_36 = arith.constant 5.000000e-01 : f32
    %87 = vector.broadcast %cst_36 : f32 to vector<64x16xf32>
    %88 = arith.mulf %87, %86 : vector<64x16xf32>
    %cst_37 = arith.constant 4.471500e-02 : f32
    %89 = vector.broadcast %cst_37 : f32 to vector<64x16xf32>
    %90 = arith.mulf %89, %86 : vector<64x16xf32>
    %91 = arith.mulf %90, %86 : vector<64x16xf32>
    %92 = arith.mulf %91, %86 : vector<64x16xf32>
    %93 = arith.addf %86, %92 : vector<64x16xf32>
    %cst_38 = arith.constant 0.797884583 : f32
    %94 = vector.broadcast %cst_38 : f32 to vector<64x16xf32>
    %95 = arith.mulf %94, %93 : vector<64x16xf32>
    %96 = math.tanh %95 : vector<64x16xf32>
    %cst_39 = arith.constant 1.000000e+00 : f32
    %97 = vector.broadcast %cst_39 : f32 to vector<64x16xf32>
    %98 = arith.addf %97, %96 : vector<64x16xf32>
    %99 = arith.mulf %88, %98 : vector<64x16xf32>
    %c152 = arith.constant 152 : index
    %c0_40 = arith.constant 0 : index
    %100 = vector.load %arg1[%c152, %c0_40] : memref<560x128xf32, #tpu.memory_space<vmem>>, vector<16x16xf32>
    %cst_41 = arith.constant dense<0.000000e+00> : vector<64x16xf32>
    %101 = tpu.matmul %99, %100, %cst_41 {dimension_numbers = #tpu.dot_dimension_numbers<[1], [0], [0], [1], [0, 0, 1, 1], [], []>} : vector<64x16xf32>, vector<16x16xf32>, vector<64x16xf32> -> vector<64x16xf32>
    %c168 = arith.constant 168 : index
    %c0_42 = arith.constant 0 : index
    %102 = vector.load %arg1[%c168, %c0_42] : memref<560x128xf32, #tpu.memory_space<vmem>>, vector<1x16xf32>
    %103 = vector.broadcast %102 : vector<1x16xf32> to vector<64x16xf32>
    %104 = arith.addf %101, %103 : vector<64x16xf32>
    %105 = arith.addf %7, %104 : vector<64x16xf32>
    %106 = arith.addf %4, %105 : vector<64x16xf32>
    %107 = arith.addf %33, %81 : vector<64x8xf32>
    %108 = arith.addf %57, %9 : vector<64x4xf32>
    %109 = tpu.concatenate %106, %107, %108 in 1 : vector<64x16xf32>, vector<64x8xf32>, vector<64x4xf32> -> vector<64x28xf32>
    %c176 = arith.constant 176 : index
    %c0_43 = arith.constant 0 : index
    %110 = vector.load %arg1[%c176, %c0_43] : memref<560x128xf32, #tpu.memory_space<vmem>>, vector<128x64xf32>
    %cst_44 = arith.constant dense<0.000000e+00> : vector<128x28xf32>
    %111 = tpu.matmul %110, %109, %cst_44 {dimension_numbers = #tpu.dot_dimension_numbers<[1], [0], [0], [1], [0, 0, 1, 1], [], []>} : vector<128x64xf32>, vector<64x28xf32>, vector<128x28xf32> -> vector<128x28xf32>
    %c304 = arith.constant 304 : index
    %c0_45 = arith.constant 0 : index
    %112 = vector.load %arg1[%c304, %c0_45] : memref<560x128xf32, #tpu.memory_space<vmem>>, vector<128x1xf32>
    %113 = vector.broadcast %112 : vector<128x1xf32> to vector<128x28xf32>
    %114 = arith.addf %111, %113 : vector<128x28xf32>
    %cst_46 = arith.constant 5.000000e-01 : f32
    %115 = vector.broadcast %cst_46 : f32 to vector<128x28xf32>
    %116 = arith.mulf %115, %114 : vector<128x28xf32>
    %cst_47 = arith.constant 4.471500e-02 : f32
    %117 = vector.broadcast %cst_47 : f32 to vector<128x28xf32>
    %118 = arith.mulf %117, %114 : vector<128x28xf32>
    %119 = arith.mulf %118, %114 : vector<128x28xf32>
    %120 = arith.mulf %119, %114 : vector<128x28xf32>
    %121 = arith.addf %114, %120 : vector<128x28xf32>
    %cst_48 = arith.constant 0.797884583 : f32
    %122 = vector.broadcast %cst_48 : f32 to vector<128x28xf32>
    %123 = arith.mulf %122, %121 : vector<128x28xf32>
    %124 = math.tanh %123 : vector<128x28xf32>
    %cst_49 = arith.constant 1.000000e+00 : f32
    %125 = vector.broadcast %cst_49 : f32 to vector<128x28xf32>
    %126 = arith.addf %125, %124 : vector<128x28xf32>
    %127 = arith.mulf %116, %126 : vector<128x28xf32>
    %c432 = arith.constant 432 : index
    %c0_50 = arith.constant 0 : index
    %128 = vector.load %arg1[%c432, %c0_50] : memref<560x128xf32, #tpu.memory_space<vmem>>, vector<64x128xf32>
    %cst_51 = arith.constant dense<0.000000e+00> : vector<64x28xf32>
    %129 = tpu.matmul %128, %127, %cst_51 {dimension_numbers = #tpu.dot_dimension_numbers<[1], [0], [0], [1], [0, 0, 1, 1], [], []>} : vector<64x128xf32>, vector<128x28xf32>, vector<64x28xf32> -> vector<64x28xf32>
    %c496 = arith.constant 496 : index
    %c0_52 = arith.constant 0 : index
    %130 = vector.load %arg1[%c496, %c0_52] : memref<560x128xf32, #tpu.memory_space<vmem>>, vector<64x1xf32>
    %131 = vector.broadcast %130 : vector<64x1xf32> to vector<64x28xf32>
    %132 = arith.addf %129, %131 : vector<64x28xf32>
    %c0_53 = arith.constant 0 : index
    %c0_54 = arith.constant 0 : index
    %133 = vector.load %arg0[%c0_53, %c0_54] : memref<64x28xf32, #tpu.memory_space<vmem>>, vector<64x28xf32>
    %134 = arith.addf %133, %132 : vector<64x28xf32>
    %c0_55 = arith.constant 0 : index
    %c0_56 = arith.constant 0 : index
    %135 = vector.load %arg2[%c0_55, %c0_56] : memref<64x28xf32, #tpu.memory_space<vmem>>, vector<64x28xf32>
    tpu.vector_store %arg2[%c0_55, %c0_56], %134 {strides = array<i32>} : memref<64x28xf32, #tpu.memory_space<vmem>>, vector<64x28xf32>,
    return
  }
}

</mosaic_0001>

<llo_original>
// kernel: forward.1
$region0: #{forward.1}
  #allocation0 [shape = 'u32[]', space=smem, size = 0x4, offset = 0x4, fixed_abs, tag = 'smem constant byte address 0x4 - core index']
  #allocation1 [shape = 'u32[144,128]{1,0:T(1,128)}', space=vmem, size = 0x12000, scoped, tag = 'internal scratch']
  %s0 = inlined_call_operand.vmem [shape: f32[64,28], index: 0, kind: input, shape index: {}]
  %s1 = inlined_call_operand.hbm [shape: f32[560,128], index: 1, kind: input, shape index: {}]
  %s2 = inlined_call_operand.vmem [shape: f32[64,28], index: 2, kind: output, shape index: {}]
  %s3 = sld [smem:[#allocation0]]
  $region22: #{forward.1} parent=0
    _
  %s5 = ssub.s32 1, %s3
  %s6 = scalar_select 0, %s5, %s3
  $region1: #{forward.1} parent=0
    #allocation2 [shape = 'u8[286720]{0}', space=vmem, size = 0x46000, scoped, tag = 'input window, operand 1, single buffered']
    #allocation3 [shape = 's32[1]{0}', space=sflag, size = 0x4, scoped, tag = 'scoped memory for forward.1']
    %7 = vsyncpa [#allocation3], 0
    // Predicated region
    $region2: #{forward.1} parent=1 // pred_check
      _
    $region3: #{forward.1} parent=1 // pred_check_branch
      %9 = sbr.rel (0) target = $region5
    $region4: #{forward.1} parent=1 // pred_region
      _
    $region5: #{forward.1} parent=1 // pred_fallthru
      _
    // Predicated region
    $region6: #{forward.1} parent=1 // pred_check
      _
    $region7: #{forward.1} parent=1 // pred_check_branch
      %11 = sbr.rel (0) target = $region9
    $region8: #{forward.1} parent=1 // pred_region
      %s13 = ssub.s32 8960, 8960
      %14 = vsyncadd [#allocation3], %s13
      %s15 = sshll.u32 [#allocation2], 4
      %s16 = int_to_ptr.vmem [resolvable:$true] %s15
      %21 = dma.hbm_to_vmem [thread:$0]  %s1, 8960, %s16, [#allocation3], 128, 128, 8
    $region9: #{forward.1} parent=1 // pred_fallthru
      _
    // Predicated region
    $region10: #{forward.1} parent=1 // pred_check
      _
    $region11: #{forward.1} parent=1 // pred_check_branch
      %23 = sbr.rel (0) target = $region13
    $region12: #{forward.1} parent=1 // pred_region
      %24 = dma.done [#allocation3], 8960
    $region13: #{forward.1} parent=1 // pred_fallthru
      _
    %v25 = vld [vmem:[%s0] sm:$0xff]
    %v26 = vld [vmem:[%s0 + $0x8] sm:$0xff]
    %v27 = vld [vmem:[%s0 + $0x10] sm:$0xff]
    %v28 = vld [vmem:[%s0 + $0x18] sm:$0xff]
    %v29 = vld [vmem:[%s0 + $0x20] sm:$0xff]
    %v30 = vld [vmem:[%s0 + $0x28] sm:$0xff]
    %v31 = vld [vmem:[%s0 + $0x30] sm:$0xff]
    %v32 = vld [vmem:[%s0 + $0x38] sm:$0xff]
    %v33 = vld [vmem:[#allocation2] sm:$0xff]
    %v34 = vld [vmem:[#allocation2 + $0x8] sm:$0xff]
    %v35 = vld [vmem:[#allocation2 + $0x10] sm:$0xff]
    %v36 = vld [vmem:[#allocation2 + $0x18] sm:$0xf]
    %vm37 = vcmask 228352
    %v39 = vsel %vm37, %v25, 0
    %v42 = vsel %vm37, %v26, 0
    %v45 = vsel %vm37, %v27, 0
    %v48 = vsel %vm37, %v28, 0
    %v51 = vsel %vm37, %v29, 0
    %v54 = vsel %vm37, %v30, 0
    %v57 = vsel %vm37, %v31, 0
    %v60 = vsel %vm37, %v32, 0
    %vm62 = vcmask 1043456
    %v64 = vsel %vm62, %v36, 0
    %66 = vmatprep.subr.mxu0 0.0
    %67 = vmatpush1.msra.mxu0 %v33
    %68 = vmatprep.subr.mxu0 0.0
    %69 = vmatpush1.msra.mxu0 %v34
    %70 = vmatprep.subr.mxu0 0.0
    %71 = vmatpush1.msra.mxu0 %v35
    %72 = vmatprep.subr.mxu0 0.0
    %73 = vmatpush1.msra.mxu0 %v64
    %74 = vmatprep.subr.mxu0 0.0
    %75 = vmatpush1.msra.mxu0 0.0
    %76 = vmatprep.subr.mxu0 0.0
    %77 = vmatpush1.msra.mxu0 0.0
    %78 = vmatprep.subr.mxu0 0.0
    %79 = vmatpush1.msra.mxu0 0.0
    %80 = vmatprep.subr.mxu0 0.0
    %81 = vmatpush1.msra.mxu0 0.0
    %82 = vmatprep.subr.mxu0 0.0
    %83 = vmatpush1.msra.mxu0 0.0
    %84 = vmatprep.subr.mxu0 0.0
    %85 = vmatpush1.msra.mxu0 0.0
    %86 = vmatprep.subr.mxu0 0.0
    %87 = vmatpush1.msra.mxu0 0.0
    %88 = vmatprep.subr.mxu0 0.0
    %89 = vmatpush1.msra.mxu0 0.0
    %90 = vmatprep.subr.mxu0 0.0
    %91 = vmatpush1.msra.mxu0 0.0
    %92 = vmatprep.subr.mxu0 0.0
    %93 = vmatpush1.msra.mxu0 0.0
    %94 = vmatprep.subr.mxu0 0.0
    %95 = vmatpush1.msra.mxu0 0.0
    %96 = vmatprep.subr.mxu0 0.0
    %97 = vmatpush1.msra.mxu0 0.0
    %98 = vmatprep.subr.mxu0 0.0
    %99 = vmatpush1.msra.mxu0 0.0
    %100 = vmatprep.subr.mxu0 0.0
    %101 = vmatpush1.msra.mxu0 0.0
    %102 = vmatprep.subr.mxu0 0.0
    %103 = vmatpush1.msra.mxu0 0.0
    %104 = vmatprep.subr.mxu0 0.0
    %105 = vmatpush1.msra.mxu0 0.0
    %106 = vmatprep.subr.mxu0 0.0
    %107 = vmatpush1.msra.mxu0 0.0
    %108 = vmatprep.subr.mxu0 0.0
    %109 = vmatpush1.msra.mxu0 0.0
    %110 = vmatprep.subr.mxu0 0.0
    %111 = vmatpush1.msra.mxu0 0.0
    %112 = vmatprep.subr.mxu0 0.0
    %113 = vmatpush1.msra.mxu0 0.0
    %114 = vmatprep.subr.mxu0 0.0
    %115 = vmatpush1.msra.mxu0 0.0
    %116 = vmatprep.subr.mxu0 0.0
    %117 = vmatpush1.msra.mxu0 0.0
    %118 = vmatprep.subr.mxu0 0.0
    %119 = vmatpush1.msra.mxu0 0.0
    %120 = vmatprep.subr.mxu0 0.0
    %121 = vmatpush1.msra.mxu0 0.0
    %122 = vmatprep.subr.mxu0 0.0
    %123 = vmatpush1.msra.mxu0 0.0
    %124 = vmatprep.subr.mxu0 0.0
    %125 = vmatpush1.msra.mxu0 0.0
    %126 = vmatprep.subr.mxu0 0.0
    %127 = vmatpush1.msra.mxu0 0.0
    %128 = vmatprep.subr.mxu0 0.0
    %129 = vmatpush1.msra.mxu0 0.0
    %130 = vmatprep.mubr.f32.mxu0 0.0
    %131 = vmatmul.mubr.f32.gmra.mrb[0].mxu0 %v39
    %v132 = vpop.f32.mrb[0].mxu0
    %v133 = vadd.f32 0.0, %v132
    %v134 = vpop.f32.mrb[0].mxu0
    %135 = vmatprep.mubr.f32.mxu0 0.0
    %136 = vmatmul.mubr.f32.gmra.mrb[0].mxu0 %v42
    %v137 = vpop.f32.mrb[0].mxu0
    %v138 = vadd.f32 0.0, %v137
    %v139 = vpop.f32.mrb[0].mxu0
    %140 = vmatprep.mubr.f32.mxu0 0.0
    %141 = vmatmul.mubr.f32.gmra.mrb[0].mxu0 %v45
    %v142 = vpop.f32.mrb[0].mxu0
    %v143 = vadd.f32 0.0, %v142
    %v144 = vpop.f32.mrb[0].mxu0
    %145 = vmatprep.mubr.f32.mxu0 0.0
    %146 = vmatmul.mubr.f32.gmra.mrb[0].mxu0 %v48
    %v147 = vpop.f32.mrb[0].mxu0
    %v148 = vadd.f32 0.0, %v147
    %v149 = vpop.f32.mrb[0].mxu0
    %150 = vmatprep.mubr.f32.mxu0 0.0
    %151 = vmatmul.mubr.f32.gmra.mrb[0].mxu0 %v51
    %v152 = vpop.f32.mrb[0].mxu0
    %v153 = vadd.f32 0.0, %v152
    %v154 = vpop.f32.mrb[0].mxu0
    %155 = vmatprep.mubr.f32.mxu0 0.0
    %156 = vmatmul.mubr.f32.gmra.mrb[0].mxu0 %v54
    %v157 = vpop.f32.mrb[0].mxu0
    %v158 = vadd.f32 0.0, %v157
    %v159 = vpop.f32.mrb[0].mxu0
    %160 = vmatprep.mubr.f32.mxu0 0.0
    %161 = vmatmul.mubr.f32.gmra.mrb[0].mxu0 %v57
    %v162 = vpop.f32.mrb[0].mxu0
    %v163 = vadd.f32 0.0, %v162
    %v164 = vpop.f32.mrb[0].mxu0
    %165 = vmatprep.mubr.f32.mxu0 0.0
    %166 = vmatmul.mubr.f32.gmra.mrb[0].mxu0 %v60
    %v167 = vpop.f32.mrb[0].mxu0
    %v168 = vadd.f32 0.0, %v167
    %v169 = vpop.f32.mrb[0].mxu0
    %170 = vdwg.mxu0
    %v171 = vsub.f32 %v25, %v133
    %v172 = vsub.f32 %v26, %v138
    %v173 = vsub.f32 %v27, %v143
    %v174 = vsub.f32 %v28, %v148
    %v175 = vsub.f32 %v29, %v153
    %v176 = vsub.f32 %v30, %v158
    %v177 = vsub.f32 %v31, %v163
    %v178 = vsub.f32 %v32, %v168
    %v179 = vld [vmem:[#allocation2 + $0x20] sm:$0xff]
    %v180 = vld [vmem:[#allocation2 + $0x28] sm:$0xff]
    %v181 = vld [vmem:[#allocation2 + $0x30] sm:$0x1]
    %v182 = vlaneseq
    %v183 = vshrl.u32 %v182, 7
    %v184 = vsub.s32 0, %v183
    %v185 = vrot.slane %v181, %v184
    %vm186 = vcmask 130048
    %v188 = vsel %vm186, %v171, 0
    %v191 = vsel %vm186, %v172, 0
    %v194 = vsel %vm186, %v173, 0
    %v197 = vsel %vm186, %v174, 0
    %v200 = vsel %vm186, %v175, 0
    %v203 = vsel %vm186, %v176, 0
    %v206 = vsel %vm186, %v177, 0
    %v209 = vsel %vm186, %v178, 0
    %211 = vmatprep.subr.mxu0 0.0
    %212 = vmatpush1.msra.mxu0 %v179
    %213 = vmatprep.subr.mxu0 0.0
    %214 = vmatpush1.msra.mxu0 %v180
    %215 = vmatprep.subr.mxu0 0.0
    %216 = vmatpush1.msra.mxu0 0.0
    %217 = vmatprep.subr.mxu0 0.0
    %218 = vmatpush1.msra.mxu0 0.0
    %219 = vmatprep.subr.mxu0 0.0
    %220 = vmatpush1.msra.mxu0 0.0
    %221 = vmatprep.subr.mxu0 0.0
    %222 = vmatpush1.msra.mxu0 0.0
    %223 = vmatprep.subr.mxu0 0.0
    %224 = vmatpush1.msra.mxu0 0.0
    %225 = vmatprep.subr.mxu0 0.0
    %226 = vmatpush1.msra.mxu0 0.0
    %227 = vmatprep.subr.mxu0 0.0
    %228 = vmatpush1.msra.mxu0 0.0
    %229 = vmatprep.subr.mxu0 0.0
    %230 = vmatpush1.msra.mxu0 0.0
    %231 = vmatprep.subr.mxu0 0.0
    %232 = vmatpush1.msra.mxu0 0.0
    %233 = vmatprep.subr.mxu0 0.0
    %234 = vmatpush1.msra.mxu0 0.0
    %235 = vmatprep.subr.mxu0 0.0
    %236 = vmatpush1.msra.mxu0 0.0
    %237 = vmatprep.subr.mxu0 0.0
    %238 = vmatpush1.msra.mxu0 0.0
    %239 = vmatprep.subr.mxu0 0.0
    %240 = vmatpush1.msra.mxu0 0.0
    %241 = vmatprep.subr.mxu0 0.0
    %242 = vmatpush1.msra.mxu0 0.0
    %243 = vmatprep.subr.mxu0 0.0
    %244 = vmatpush1.msra.mxu0 0.0
    %245 = vmatprep.subr.mxu0 0.0
    %246 = vmatpush1.msra.mxu0 0.0
    %247 = vmatprep.subr.mxu0 0.0
    %248 = vmatpush1.msra.mxu0 0.0
    %249 = vmatprep.subr.mxu0 0.0
    %250 = vmatpush1.msra.mxu0 0.0
    %251 = vmatprep.subr.mxu0 0.0
    %252 = vmatpush1.msra.mxu0 0.0
    %253 = vmatprep.subr.mxu0 0.0
    %254 = vmatpush1.msra.mxu0 0.0
    %255 = vmatprep.subr.mxu0 0.0
    %256 = vmatpush1.msra.mxu0 0.0
    %257 = vmatprep.subr.mxu0 0.0
    %258 = vmatpush1.msra.mxu0 0.0
    %259 = vmatprep.subr.mxu0 0.0
    %260 = vmatpush1.msra.mxu0 0.0
    %261 = vmatprep.subr.mxu0 0.0
    %262 = vmatpush1.msra.mxu0 0.0
    %263 = vmatprep.subr.mxu0 0.0
    %264 = vmatpush1.msra.mxu0 0.0
    %265 = vmatprep.subr.mxu0 0.0
    %266 = vmatpush1.msra.mxu0 0.0
    %267 = vmatprep.subr.mxu0 0.0
    %268 = vmatpush1.msra.mxu0 0.0
    %269 = vmatprep.subr.mxu0 0.0
    %270 = vmatpush1.msra.mxu0 0.0
    %271 = vmatprep.subr.mxu0 0.0
    %272 = vmatpush1.msra.mxu0 0.0
    %273 = vmatprep.subr.mxu0 0.0
    %274 = vmatpush1.msra.mxu0 0.0
    %275 = vmatprep.mubr.f32.mxu0 0.0
    %276 = vmatmul.mubr.f32.gmra.mrb[0].mxu0 %v188
    %v277 = vpop.f32.mrb[0].mxu0
    %v278 = vadd.f32 %v185, %v277
    %v279 = vpop.f32.mrb[0].mxu0
    %280 = vmatprep.mubr.f32.mxu0 0.0
    %281 = vmatmul.mubr.f32.gmra.mrb[0].mxu0 %v191
    %v282 = vpop.f32.mrb[0].mxu0
    %v283 = vadd.f32 %v185, %v282
    %v284 = vpop.f32.mrb[0].mxu0
    %285 = vmatprep.mubr.f32.mxu0 0.0
    %286 = vmatmul.mubr.f32.gmra.mrb[0].mxu0 %v194
    %v287 = vpop.f32.mrb[0].mxu0
    %v288 = vadd.f32 %v185, %v287
    %v289 = vpop.f32.mrb[0].mxu0
    %290 = vmatprep.mubr.f32.mxu0 0.0
    %291 = vmatmul.mubr.f32.gmra.mrb[0].mxu0 %v197
    %v292 = vpop.f32.mrb[0].mxu0
    %v293 = vadd.f32 %v185, %v292
    %v294 = vpop.f32.mrb[0].mxu0
    %295 = vmatprep.mubr.f32.mxu0 0.0
    %296 = vmatmul.mubr.f32.gmra.mrb[0].mxu0 %v200
    %v297 = vpop.f32.mrb[0].mxu0
    %v298 = vadd.f32 %v185, %v297
    %v299 = vpop.f32.mrb[0].mxu0
    %300 = vmatprep.mubr.f32.mxu0 0.0
    %301 = vmatmul.mubr.f32.gmra.mrb[0].mxu0 %v203
    %v302 = vpop.f32.mrb[0].mxu0
    %v303 = vadd.f32 %v185, %v302
    %v304 = vpop.f32.mrb[0].mxu0
    %305 = vmatprep.mubr.f32.mxu0 0.0
    %306 = vmatmul.mubr.f32.gmra.mrb[0].mxu0 %v206
    %v307 = vpop.f32.mrb[0].mxu0
    %v308 = vadd.f32 %v185, %v307
    %v309 = vpop.f32.mrb[0].mxu0
    %310 = vmatprep.mubr.f32.mxu0 0.0
    %311 = vmatmul.mubr.f32.gmra.mrb[0].mxu0 %v209
    %v312 = vpop.f32.mrb[0].mxu0
    %v313 = vadd.f32 %v185, %v312
    %v314 = vpop.f32.mrb[0].mxu0
    %315 = vdwg.mxu0
    %v316 = vmul.f32 %v278, 0.5
    %v317 = vmul.f32 %v283, 0.5
    %v318 = vmul.f32 %v288, 0.5
    %v319 = vmul.f32 %v293, 0.5
    %v320 = vmul.f32 %v298, 0.5
    %v321 = vmul.f32 %v303, 0.5
    %v322 = vmul.f32 %v308, 0.5
    %v323 = vmul.f32 %v313, 0.5
    %v324 = vmul.f32 %v278, 0.044715
    %v325 = vmul.f32 %v283, 0.044715
    %v326 = vmul.f32 %v288, 0.044715
    %v327 = vmul.f32 %v293, 0.044715
    %v328 = vmul.f32 %v298, 0.044715
    %v329 = vmul.f32 %v303, 0.044715
    %v330 = vmul.f32 %v308, 0.044715
    %v331 = vmul.f32 %v313, 0.044715
    %v332 = vmul.f32 %v324, %v278
    %v333 = vmul.f32 %v325, %v283
    %v334 = vmul.f32 %v326, %v288
    %v335 = vmul.f32 %v327, %v293
    %v336 = vmul.f32 %v328, %v298
    %v337 = vmul.f32 %v329, %v303
    %v338 = vmul.f32 %v330, %v308
    %v339 = vmul.f32 %v331, %v313
    %v340 = vmul.f32 %v332, %v278
    %v341 = vmul.f32 %v333, %v283
    %v342 = vmul.f32 %v334, %v288
    %v343 = vmul.f32 %v335, %v293
    %v344 = vmul.f32 %v336, %v298
    %v345 = vmul.f32 %v337, %v303
    %v346 = vmul.f32 %v338, %v308
    %v347 = vmul.f32 %v339, %v313
    %v348 = vadd.f32 %v278, %v340
    %v349 = vadd.f32 %v283, %v341
    %v350 = vadd.f32 %v288, %v342
    %v351 = vadd.f32 %v293, %v343
    %v352 = vadd.f32 %v298, %v344
    %v353 = vadd.f32 %v303, %v345
    %v354 = vadd.f32 %v308, %v346
    %v355 = vadd.f32 %v313, %v347
    %v356 = vmul.f32 %v348, 0.7978846
    %v357 = vmul.f32 %v349, 0.7978846
    %v358 = vmul.f32 %v350, 0.7978846
    %v359 = vmul.f32 %v351, 0.7978846
    %v360 = vmul.f32 %v352, 0.7978846
    %v361 = vmul.f32 %v353, 0.7978846
    %v362 = vmul.f32 %v354, 0.7978846
    %v363 = vmul.f32 %v355, 0.7978846
    %v364 = vtanh.pop %v356
    %v365 = vtanh.pop %v357
    %v366 = vtanh.pop %v358
    %v367 = vtanh.pop %v359
    %v368 = vtanh.pop %v360
    %v369 = vtanh.pop %v361
    %v370 = vtanh.pop %v362
    %v371 = vtanh.pop %v363
    %v372 = vadd.f32 %v364, 1.0
    %v373 = vadd.f32 %v365, 1.0
    %v374 = vadd.f32 %v366, 1.0
    %v375 = vadd.f32 %v367, 1.0
    %v376 = vadd.f32 %v368, 1.0
    %v377 = vadd.f32 %v369, 1.0
    %v378 = vadd.f32 %v370, 1.0
    %v379 = vadd.f32 %v371, 1.0
    %v380 = vmul.f32 %v316, %v372
    %v381 = vmul.f32 %v317, %v373
    %v382 = vmul.f32 %v318, %v374
    %v383 = vmul.f32 %v319, %v375
    %v384 = vmul.f32 %v320, %v376
    %v385 = vmul.f32 %v321, %v377
    %v386 = vmul.f32 %v322, %v378
    %v387 = vmul.f32 %v323, %v379
    %v388 = vld [vmem:[#allocation2 + $0x38] sm:$0xff]
    %v389 = vld [vmem:[#allocation2 + $0x40] sm:$0x1]
    %v390 = vlaneseq
    %v391 = vshrl.u32 %v390, 7
    %v392 = vsub.s32 0, %v391
    %v393 = vrot.slane %v389, %v392
    %vm394 = vcmask 64512
    %v396 = vsel %vm394, %v380, 0
    %v399 = vsel %vm394, %v381, 0
    %v402 = vsel %vm394, %v382, 0
    %v405 = vsel %vm394, %v383, 0
    %v408 = vsel %vm394, %v384, 0
    %v411 = vsel %vm394, %v385, 0
    %v414 = vsel %vm394, %v386, 0
    %v417 = vsel %vm394, %v387, 0
    %419 = vmatprep.subr.mxu0 0.0
    %420 = vmatpush1.msra.mxu0 %v388
    %421 = vmatprep.subr.mxu0 0.0
    %422 = vmatpush1.msra.mxu0 0.0
    %423 = vmatprep.subr.mxu0 0.0
    %424 = vmatpush1.msra.mxu0 0.0
    %425 = vmatprep.subr.mxu0 0.0
    %426 = vmatpush1.msra.mxu0 0.0
    %427 = vmatprep.subr.mxu0 0.0
    %428 = vmatpush1.msra.mxu0 0.0
    %429 = vmatprep.subr.mxu0 0.0
    %430 = vmatpush1.msra.mxu0 0.0
    %431 = vmatprep.subr.mxu0 0.0
    %432 = vmatpush1.msra.mxu0 0.0
    %433 = vmatprep.subr.mxu0 0.0
    %434 = vmatpush1.msra.mxu0 0.0
    %435 = vmatprep.subr.mxu0 0.0
    %436 = vmatpush1.msra.mxu0 0.0
    %437 = vmatprep.subr.mxu0 0.0
    %438 = vmatpush1.msra.mxu0 0.0
    %439 = vmatprep.subr.mxu0 0.0
    %440 = vmatpush1.msra.mxu0 0.0
    %441 = vmatprep.subr.mxu0 0.0
    %442 = vmatpush1.msra.mxu0 0.0
    %443 = vmatprep.subr.mxu0 0.0
    %444 = vmatpush1.msra.mxu0 0.0
    %445 = vmatprep.subr.mxu0 0.0
    %446 = vmatpush1.msra.mxu0 0.0
    %447 = vmatprep.subr.mxu0 0.0
    %448 = vmatpush1.msra.mxu0 0.0
    %449 = vmatprep.subr.mxu0 0.0
    %450 = vmatpush1.msra.mxu0 0.0
    %451 = vmatprep.subr.mxu0 0.0
    %452 = vmatpush1.msra.mxu0 0.0
    %453 = vmatprep.subr.mxu0 0.0
    %454 = vmatpush1.msra.mxu0 0.0
    %455 = vmatprep.subr.mxu0 0.0
    %456 = vmatpush1.msra.mxu0 0.0
    %457 = vmatprep.subr.mxu0 0.0
    %458 = vmatpush1.msra.mxu0 0.0
    %459 = vmatprep.subr.mxu0 0.0
    %460 = vmatpush1.msra.mxu0 0.0
    %461 = vmatprep.subr.mxu0 0.0
    %462 = vmatpush1.msra.mxu0 0.0
    %463 = vmatprep.subr.mxu0 0.0
    %464 = vmatpush1.msra.mxu0 0.0
    %465 = vmatprep.subr.mxu0 0.0
    %466 = vmatpush1.msra.mxu0 0.0
    %467 = vmatprep.subr.mxu0 0.0
    %468 = vmatpush1.msra.mxu0 0.0
    %469 = vmatprep.subr.mxu0 0.0
    %470 = vmatpush1.msra.mxu0 0.0
    %471 = vmatprep.subr.mxu0 0.0
    %472 = vmatpush1.msra.mxu0 0.0
    %473 = vmatprep.subr.mxu0 0.0
    %474 = vmatpush1.msra.mxu0 0.0
    %475 = vmatprep.subr.mxu0 0.0
    %476 = vmatpush1.msra.mxu0 0.0
    %477 = vmatprep.subr.mxu0 0.0
    %478 = vmatpush1.msra.mxu0 0.0
    %479 = vmatprep.subr.mxu0 0.0
    %480 = vmatpush1.msra.mxu0 0.0
    %481 = vmatprep.subr.mxu0 0.0
    %482 = vmatpush1.msra.mxu0 0.0
    %483 = vmatprep.mubr.f32.mxu0 0.0
    %484 = vmatmul.mubr.f32.gmra.mrb[0].mxu0 %v396
    %v485 = vpop.f32.mrb[0].mxu0
    %v486 = vadd.f32 %v393, %v485
    %v487 = vpop.f32.mrb[0].mxu0
    %488 = vmatprep.mubr.f32.mxu0 0.0
    %489 = vmatmul.mubr.f32.gmra.mrb[0].mxu0 %v399
    %v490 = vpop.f32.mrb[0].mxu0
    %v491 = vadd.f32 %v393, %v490
    %v492 = vpop.f32.mrb[0].mxu0
    %493 = vmatprep.mubr.f32.mxu0 0.0
    %494 = vmatmul.mubr.f32.gmra.mrb[0].mxu0 %v402
    %v495 = vpop.f32.mrb[0].mxu0
    %v496 = vadd.f32 %v393, %v495
    %v497 = vpop.f32.mrb[0].mxu0
    %498 = vmatprep.mubr.f32.mxu0 0.0
    %499 = vmatmul.mubr.f32.gmra.mrb[0].mxu0 %v405
    %v500 = vpop.f32.mrb[0].mxu0
    %v501 = vadd.f32 %v393, %v500
    %v502 = vpop.f32.mrb[0].mxu0
    %503 = vmatprep.mubr.f32.mxu0 0.0
    %504 = vmatmul.mubr.f32.gmra.mrb[0].mxu0 %v408
    %v505 = vpop.f32.mrb[0].mxu0
    %v506 = vadd.f32 %v393, %v505
    %v507 = vpop.f32.mrb[0].mxu0
    %508 = vmatprep.mubr.f32.mxu0 0.0
    %509 = vmatmul.mubr.f32.gmra.mrb[0].mxu0 %v411
    %v510 = vpop.f32.mrb[0].mxu0
    %v511 = vadd.f32 %v393, %v510
    %v512 = vpop.f32.mrb[0].mxu0
    %513 = vmatprep.mubr.f32.mxu0 0.0
    %514 = vmatmul.mubr.f32.gmra.mrb[0].mxu0 %v414
    %v515 = vpop.f32.mrb[0].mxu0
    %v516 = vadd.f32 %v393, %v515
    %v517 = vpop.f32.mrb[0].mxu0
    %518 = vmatprep.mubr.f32.mxu0 0.0
    %519 = vmatmul.mubr.f32.gmra.mrb[0].mxu0 %v417
    %v520 = vpop.f32.mrb[0].mxu0
    %v521 = vadd.f32 %v393, %v520
    %v522 = vpop.f32.mrb[0].mxu0
    %523 = vdwg.mxu0
    %532 = vrot.lane.b32.xlu0 %v486, 16
    %v533 = vpop.permute.xlu0 %532
    %534 = vrot.lane.b32.xlu0 %v491, 16
    %v535 = vpop.permute.xlu0 %534
    %536 = vrot.lane.b32.xlu0 %v496, 16
    %v537 = vpop.permute.xlu0 %536
    %538 = vrot.lane.b32.xlu0 %v501, 16
    %v539 = vpop.permute.xlu0 %538
    %540 = vrot.lane.b32.xlu0 %v506, 16
    %v541 = vpop.permute.xlu0 %540
    %542 = vrot.lane.b32.xlu0 %v511, 16
    %v543 = vpop.permute.xlu0 %542
    %544 = vrot.lane.b32.xlu0 %v516, 16
    %v545 = vpop.permute.xlu0 %544
    %546 = vrot.lane.b32.xlu0 %v521, 16
    %v547 = vpop.permute.xlu0 %546
    %v556 = vadd.f32 %v171, %v533
    %v557 = vadd.f32 %v172, %v535
    %v558 = vadd.f32 %v173, %v537
    %v559 = vadd.f32 %v174, %v539
    %v560 = vadd.f32 %v175, %v541
    %v561 = vadd.f32 %v176, %v543
    %v562 = vadd.f32 %v177, %v545
    %v563 = vadd.f32 %v178, %v547
    %v564 = vld [vmem:[#allocation2 + $0x48] sm:$0xff]
    %v565 = vld [vmem:[#allocation2 + $0x50] sm:$0x1]
    %v566 = vlaneseq
    %v567 = vshrl.u32 %v566, 7
    %v568 = vsub.s32 0, %v567
    %v569 = vrot.slane %v565, %v568
    %578 = vrot.lane.b32.xlu0 %v556, 112
    %v579 = vpop.permute.xlu0 %578
    %580 = vrot.lane.b32.xlu0 %v557, 112
    %v581 = vpop.permute.xlu0 %580
    %582 = vrot.lane.b32.xlu0 %v558, 112
    %v583 = vpop.permute.xlu0 %582
    %584 = vrot.lane.b32.xlu0 %v559, 112
    %v585 = vpop.permute.xlu0 %584
    %586 = vrot.lane.b32.xlu0 %v560, 112
    %v587 = vpop.permute.xlu0 %586
    %588 = vrot.lane.b32.xlu0 %v561, 112
    %v589 = vpop.permute.xlu0 %588
    %590 = vrot.lane.b32.xlu0 %v562, 112
    %v591 = vpop.permute.xlu0 %590
    %592 = vrot.lane.b32.xlu0 %v563, 112
    %v593 = vpop.permute.xlu0 %592
    %v594 = vsel %vm394, %v579, 0
    %v596 = vsel %vm394, %v581, 0
    %v598 = vsel %vm394, %v583, 0
    %v600 = vsel %vm394, %v585, 0
    %v602 = vsel %vm394, %v587, 0
    %v604 = vsel %vm394, %v589, 0
    %v606 = vsel %vm394, %v591, 0
    %v608 = vsel %vm394, %v593, 0
    %610 = vmatprep.subr.mxu0 0.0
    %611 = vmatpush1.msra.mxu0 %v564
    %612 = vmatprep.subr.mxu0 0.0
    %613 = vmatpush1.msra.mxu0 0.0
    %614 = vmatprep.subr.mxu0 0.0
    %615 = vmatpush1.msra.mxu0 0.0
    %616 = vmatprep.subr.mxu0 0.0
    %617 = vmatpush1.msra.mxu0 0.0
    %618 = vmatprep.subr.mxu0 0.0
    %619 = vmatpush1.msra.mxu0 0.0
    %620 = vmatprep.subr.mxu0 0.0
    %621 = vmatpush1.msra.mxu0 0.0
    %622 = vmatprep.subr.mxu0 0.0
    %623 = vmatpush1.msra.mxu0 0.0
    %624 = vmatprep.subr.mxu0 0.0
    %625 = vmatpush1.msra.mxu0 0.0
    %626 = vmatprep.subr.mxu0 0.0
    %627 = vmatpush1.msra.mxu0 0.0
    %628 = vmatprep.subr.mxu0 0.0
    %629 = vmatpush1.msra.mxu0 0.0
    %630 = vmatprep.subr.mxu0 0.0
    %631 = vmatpush1.msra.mxu0 0.0
    %632 = vmatprep.subr.mxu0 0.0
    %633 = vmatpush1.msra.mxu0 0.0
    %634 = vmatprep.subr.mxu0 0.0
    %635 = vmatpush1.msra.mxu0 0.0
    %636 = vmatprep.subr.mxu0 0.0
    %637 = vmatpush1.msra.mxu0 0.0
    %638 = vmatprep.subr.mxu0 0.0
    %639 = vmatpush1.msra.mxu0 0.0
    %640 = vmatprep.subr.mxu0 0.0
    %641 = vmatpush1.msra.mxu0 0.0
    %642 = vmatprep.subr.mxu0 0.0
    %643 = vmatpush1.msra.mxu0 0.0
    %644 = vmatprep.subr.mxu0 0.0
    %645 = vmatpush1.msra.mxu0 0.0
    %646 = vmatprep.subr.mxu0 0.0
    %647 = vmatpush1.msra.mxu0 0.0
    %648 = vmatprep.subr.mxu0 0.0
    %649 = vmatpush1.msra.mxu0 0.0
    %650 = vmatprep.subr.mxu0 0.0
    %651 = vmatpush1.msra.mxu0 0.0
    %652 = vmatprep.subr.mxu0 0.0
    %653 = vmatpush1.msra.mxu0 0.0
    %654 = vmatprep.subr.mxu0 0.0
    %655 = vmatpush1.msra.mxu0 0.0
    %656 = vmatprep.subr.mxu0 0.0
    %657 = vmatpush1.msra.mxu0 0.0
    %658 = vmatprep.subr.mxu0 0.0
    %659 = vmatpush1.msra.mxu0 0.0
    %660 = vmatprep.subr.mxu0 0.0
    %661 = vmatpush1.msra.mxu0 0.0
    %662 = vmatprep.subr.mxu0 0.0
    %663 = vmatpush1.msra.mxu0 0.0
    %664 = vmatprep.subr.mxu0 0.0
    %665 = vmatpush1.msra.mxu0 0.0
    %666 = vmatprep.subr.mxu0 0.0
    %667 = vmatpush1.msra.mxu0 0.0
    %668 = vmatprep.subr.mxu0 0.0
    %669 = vmatpush1.msra.mxu0 0.0
    %670 = vmatprep.subr.mxu0 0.0
    %671 = vmatpush1.msra.mxu0 0.0
    %672 = vmatprep.subr.mxu0 0.0
    %673 = vmatpush1.msra.mxu0 0.0
    %674 = vmatprep.mubr.f32.mxu0 0.0
    %675 = vmatmul.mubr.f32.gmra.mrb[0].mxu0 %v594
    %v676 = vpop.f32.mrb[0].mxu0
    %v677 = vadd.f32 %v569, %v676
    %v678 = vpop.f32.mrb[0].mxu0
    %679 = vmatprep.mubr.f32.mxu0 0.0
    %680 = vmatmul.mubr.f32.gmra.mrb[0].mxu0 %v596
    %v681 = vpop.f32.mrb[0].mxu0
    %v682 = vadd.f32 %v569, %v681
    %v683 = vpop.f32.mrb[0].mxu0
    %684 = vmatprep.mubr.f32.mxu0 0.0
    %685 = vmatmul.mubr.f32.gmra.mrb[0].mxu0 %v598
    %v686 = vpop.f32.mrb[0].mxu0
    %v687 = vadd.f32 %v569, %v686
    %v688 = vpop.f32.mrb[0].mxu0
    %689 = vmatprep.mubr.f32.mxu0 0.0
    %690 = vmatmul.mubr.f32.gmra.mrb[0].mxu0 %v600
    %v691 = vpop.f32.mrb[0].mxu0
    %v692 = vadd.f32 %v569, %v691
    %v693 = vpop.f32.mrb[0].mxu0
    %694 = vmatprep.mubr.f32.mxu0 0.0
    %695 = vmatmul.mubr.f32.gmra.mrb[0].mxu0 %v602
    %v696 = vpop.f32.mrb[0].mxu0
    %v697 = vadd.f32 %v569, %v696
    %v698 = vpop.f32.mrb[0].mxu0
    %699 = vmatprep.mubr.f32.mxu0 0.0
    %700 = vmatmul.mubr.f32.gmra.mrb[0].mxu0 %v604
    %v701 = vpop.f32.mrb[0].mxu0
    %v702 = vadd.f32 %v569, %v701
    %v703 = vpop.f32.mrb[0].mxu0
    %704 = vmatprep.mubr.f32.mxu0 0.0
    %705 = vmatmul.mubr.f32.gmra.mrb[0].mxu0 %v606
    %v706 = vpop.f32.mrb[0].mxu0
    %v707 = vadd.f32 %v569, %v706
    %v708 = vpop.f32.mrb[0].mxu0
    %709 = vmatprep.mubr.f32.mxu0 0.0
    %710 = vmatmul.mubr.f32.gmra.mrb[0].mxu0 %v608
    %v711 = vpop.f32.mrb[0].mxu0
    %v712 = vadd.f32 %v569, %v711
    %v713 = vpop.f32.mrb[0].mxu0
    %714 = vdwg.mxu0
    %v715 = vmul.f32 %v677, 0.5
    %v716 = vmul.f32 %v682, 0.5
    %v717 = vmul.f32 %v687, 0.5
    %v718 = vmul.f32 %v692, 0.5
    %v719 = vmul.f32 %v697, 0.5
    %v720 = vmul.f32 %v702, 0.5
    %v721 = vmul.f32 %v707, 0.5
    %v722 = vmul.f32 %v712, 0.5
    %v723 = vmul.f32 %v677, 0.044715
    %v724 = vmul.f32 %v682, 0.044715
    %v725 = vmul.f32 %v687, 0.044715
    %v726 = vmul.f32 %v692, 0.044715
    %v727 = vmul.f32 %v697, 0.044715
    %v728 = vmul.f32 %v702, 0.044715
    %v729 = vmul.f32 %v707, 0.044715
    %v730 = vmul.f32 %v712, 0.044715
    %v731 = vmul.f32 %v723, %v677
    %v732 = vmul.f32 %v724, %v682
    %v733 = vmul.f32 %v725, %v687
    %v734 = vmul.f32 %v726, %v692
    %v735 = vmul.f32 %v727, %v697
    %v736 = vmul.f32 %v728, %v702
    %v737 = vmul.f32 %v729, %v707
    %v738 = vmul.f32 %v730, %v712
    %v739 = vmul.f32 %v731, %v677
    %v740 = vmul.f32 %v732, %v682
    %v741 = vmul.f32 %v733, %v687
    %v742 = vmul.f32 %v734, %v692
    %v743 = vmul.f32 %v735, %v697
    %v744 = vmul.f32 %v736, %v702
    %v745 = vmul.f32 %v737, %v707
    %v746 = vmul.f32 %v738, %v712
    %v747 = vadd.f32 %v677, %v739
    %v748 = vadd.f32 %v682, %v740
    %v749 = vadd.f32 %v687, %v741
    %v750 = vadd.f32 %v692, %v742
    %v751 = vadd.f32 %v697, %v743
    %v752 = vadd.f32 %v702, %v744
    %v753 = vadd.f32 %v707, %v745
    %v754 = vadd.f32 %v712, %v746
    %v755 = vmul.f32 %v747, 0.7978846
    %v756 = vmul.f32 %v748, 0.7978846
    %v757 = vmul.f32 %v749, 0.7978846
    %v758 = vmul.f32 %v750, 0.7978846
    %v759 = vmul.f32 %v751, 0.7978846
    %v760 = vmul.f32 %v752, 0.7978846
    %v761 = vmul.f32 %v753, 0.7978846
    %v762 = vmul.f32 %v754, 0.7978846
    %v763 = vtanh.pop %v755
    %v764 = vtanh.pop %v756
    %v765 = vtanh.pop %v757
    %v766 = vtanh.pop %v758
    %v767 = vtanh.pop %v759
    %v768 = vtanh.pop %v760
    %v769 = vtanh.pop %v761
    %v770 = vtanh.pop %v762
    %v771 = vadd.f32 %v763, 1.0
    %v772 = vadd.f32 %v764, 1.0
    %v773 = vadd.f32 %v765, 1.0
    %v774 = vadd.f32 %v766, 1.0
    %v775 = vadd.f32 %v767, 1.0
    %v776 = vadd.f32 %v768, 1.0
    %v777 = vadd.f32 %v769, 1.0
    %v778 = vadd.f32 %v770, 1.0
    %v779 = vmul.f32 %v715, %v771
    %v780 = vmul.f32 %v716, %v772
    %v781 = vmul.f32 %v717, %v773
    %v782 = vmul.f32 %v718, %v774
    %v783 = vmul.f32 %v719, %v775
    %v784 = vmul.f32 %v720, %v776
    %v785 = vmul.f32 %v721, %v777
    %v786 = vmul.f32 %v722, %v778
    %v787 = vld [vmem:[#allocation2 + $0x58] sm:$0xf]
    %v788 = vld [vmem:[#allocation2 + $0x60] sm:$0x1]
    %v789 = vlaneseq
    %v790 = vshrl.u32 %v789, 7
    %v791 = vsub.s32 0, %v790
    %v792 = vrot.slane %v788, %v791
    %vm793 = vcmask 31744
    %v795 = vsel %vm793, %v779, 0
    %v798 = vsel %vm793, %v780, 0
    %v801 = vsel %vm793, %v781, 0
    %v804 = vsel %vm793, %v782, 0
    %v807 = vsel %vm793, %v783, 0
    %v810 = vsel %vm793, %v784, 0
    %v813 = vsel %vm793, %v785, 0
    %v816 = vsel %vm793, %v786, 0
    %v819 = vsel %vm62, %v787, 0
    %821 = vmatprep.subr.mxu0 0.0
    %822 = vmatpush1.msra.mxu0 %v819
    %823 = vmatprep.subr.mxu0 0.0
    %824 = vmatpush1.msra.mxu0 0.0
    %825 = vmatprep.subr.mxu0 0.0
    %826 = vmatpush1.msra.mxu0 0.0
    %827 = vmatprep.subr.mxu0 0.0
    %828 = vmatpush1.msra.mxu0 0.0
    %829 = vmatprep.subr.mxu0 0.0
    %830 = vmatpush1.msra.mxu0 0.0
    %831 = vmatprep.subr.mxu0 0.0
    %832 = vmatpush1.msra.mxu0 0.0
    %833 = vmatprep.subr.mxu0 0.0
    %834 = vmatpush1.msra.mxu0 0.0
    %835 = vmatprep.subr.mxu0 0.0
    %836 = vmatpush1.msra.mxu0 0.0
    %837 = vmatprep.subr.mxu0 0.0
    %838 = vmatpush1.msra.mxu0 0.0
    %839 = vmatprep.subr.mxu0 0.0
    %840 = vmatpush1.msra.mxu0 0.0
    %841 = vmatprep.subr.mxu0 0.0
    %842 = vmatpush1.msra.mxu0 0.0
    %843 = vmatprep.subr.mxu0 0.0
    %844 = vmatpush1.msra.mxu0 0.0
    %845 = vmatprep.subr.mxu0 0.0
    %846 = vmatpush1.msra.mxu0 0.0
    %847 = vmatprep.subr.mxu0 0.0
    %848 = vmatpush1.msra.mxu0 0.0
    %849 = vmatprep.subr.mxu0 0.0
    %850 = vmatpush1.msra.mxu0 0.0
    %851 = vmatprep.subr.mxu0 0.0
    %852 = vmatpush1.msra.mxu0 0.0
    %853 = vmatprep.subr.mxu0 0.0
    %854 = vmatpush1.msra.mxu0 0.0
    %855 = vmatprep.subr.mxu0 0.0
    %856 = vmatpush1.msra.mxu0 0.0
    %857 = vmatprep.subr.mxu0 0.0
    %858 = vmatpush1.msra.mxu0 0.0
    %859 = vmatprep.subr.mxu0 0.0
    %860 = vmatpush1.msra.mxu0 0.0
    %861 = vmatprep.subr.mxu0 0.0
    %862 = vmatpush1.msra.mxu0 0.0
    %863 = vmatprep.subr.mxu0 0.0
    %864 = vmatpush1.msra.mxu0 0.0
    %865 = vmatprep.subr.mxu0 0.0
    %866 = vmatpush1.msra.mxu0 0.0
    %867 = vmatprep.subr.mxu0 0.0
    %868 = vmatpush1.msra.mxu0 0.0
    %869 = vmatprep.subr.mxu0 0.0
    %870 = vmatpush1.msra.mxu0 0.0
    %871 = vmatprep.subr.mxu0 0.0
    %872 = vmatpush1.msra.mxu0 0.0
    %873 = vmatprep.subr.mxu0 0.0
    %874 = vmatpush1.msra.mxu0 0.0
    %875 = vmatprep.subr.mxu0 0.0
    %876 = vmatpush1.msra.mxu0 0.0
    %877 = vmatprep.subr.mxu0 0.0
    %878 = vmatpush1.msra.mxu0 0.0
    %879 = vmatprep.subr.mxu0 0.0
    %880 = vmatpush1.msra.mxu0 0.0
    %881 = vmatprep.subr.mxu0 0.0
    %882 = vmatpush1.msra.mxu0 0.0
    %883 = vmatprep.subr.mxu0 0.0
    %884 = vmatpush1.msra.mxu0 0.0
    %885 = vmatprep.mubr.f32.mxu0 0.0
    %886 = vmatmul.mubr.f32.gmra.mrb[0].mxu0 %v795
    %v887 = vpop.f32.mrb[0].mxu0
    %v888 = vadd.f32 %v792, %v887
    %v889 = vpop.f32.mrb[0].mxu0
    %890 = vmatprep.mubr.f32.mxu0 0.0
    %891 = vmatmul.mubr.f32.gmra.mrb[0].mxu0 %v798
    %v892 = vpop.f32.mrb[0].mxu0
    %v893 = vadd.f32 %v792, %v892
    %v894 = vpop.f32.mrb[0].mxu0
    %895 = vmatprep.mubr.f32.mxu0 0.0
    %896 = vmatmul.mubr.f32.gmra.mrb[0].mxu0 %v801
    %v897 = vpop.f32.mrb[0].mxu0
    %v898 = vadd.f32 %v792, %v897
    %v899 = vpop.f32.mrb[0].mxu0
    %900 = vmatprep.mubr.f32.mxu0 0.0
    %901 = vmatmul.mubr.f32.gmra.mrb[0].mxu0 %v804
    %v902 = vpop.f32.mrb[0].mxu0
    %v903 = vadd.f32 %v792, %v902
    %v904 = vpop.f32.mrb[0].mxu0
    %905 = vmatprep.mubr.f32.mxu0 0.0
    %906 = vmatmul.mubr.f32.gmra.mrb[0].mxu0 %v807
    %v907 = vpop.f32.mrb[0].mxu0
    %v908 = vadd.f32 %v792, %v907
    %v909 = vpop.f32.mrb[0].mxu0
    %910 = vmatprep.mubr.f32.mxu0 0.0
    %911 = vmatmul.mubr.f32.gmra.mrb[0].mxu0 %v810
    %v912 = vpop.f32.mrb[0].mxu0
    %v913 = vadd.f32 %v792, %v912
    %v914 = vpop.f32.mrb[0].mxu0
    %915 = vmatprep.mubr.f32.mxu0 0.0
    %916 = vmatmul.mubr.f32.gmra.mrb[0].mxu0 %v813
    %v917 = vpop.f32.mrb[0].mxu0
    %v918 = vadd.f32 %v792, %v917
    %v919 = vpop.f32.mrb[0].mxu0
    %920 = vmatprep.mubr.f32.mxu0 0.0
    %921 = vmatmul.mubr.f32.gmra.mrb[0].mxu0 %v816
    %v922 = vpop.f32.mrb[0].mxu0
    %v923 = vadd.f32 %v792, %v922
    %v924 = vpop.f32.mrb[0].mxu0
    %925 = vdwg.mxu0
    %934 = vrot.lane.b32.xlu0 %v888, 24
    %v935 = vpop.permute.xlu0 %934
    %936 = vrot.lane.b32.xlu0 %v893, 24
    %v937 = vpop.permute.xlu0 %936
    %938 = vrot.lane.b32.xlu0 %v898, 24
    %v939 = vpop.permute.xlu0 %938
    %940 = vrot.lane.b32.xlu0 %v903, 24
    %v941 = vpop.permute.xlu0 %940
    %942 = vrot.lane.b32.xlu0 %v908, 24
    %v943 = vpop.permute.xlu0 %942
    %944 = vrot.lane.b32.xlu0 %v913, 24
    %v945 = vpop.permute.xlu0 %944
    %946 = vrot.lane.b32.xlu0 %v918, 24
    %v947 = vpop.permute.xlu0 %946
    %948 = vrot.lane.b32.xlu0 %v923, 24
    %v949 = vpop.permute.xlu0 %948
    %v958 = vadd.f32 %v171, %v935
    %v959 = vadd.f32 %v172, %v937
    %v960 = vadd.f32 %v173, %v939
    %v961 = vadd.f32 %v174, %v941
    %v962 = vadd.f32 %v175, %v943
    %v963 = vadd.f32 %v176, %v945
    %v964 = vadd.f32 %v177, %v947
    %v965 = vadd.f32 %v178, %v949
    %v966 = vld [vmem:[#allocation2 + $0x68] sm:$0xf]
    %v967 = vld [vmem:[#allocation2 + $0x70] sm:$0x1]
    %v968 = vlaneseq
    %v969 = vshrl.u32 %v968, 7
    %v970 = vsub.s32 0, %v969
    %v971 = vrot.slane %v967, %v970
    %980 = vrot.lane.b32.xlu0 %v133, 104
    %v981 = vpop.permute.xlu0 %980
    %982 = vrot.lane.b32.xlu0 %v138, 104
    %v983 = vpop.permute.xlu0 %982
    %984 = vrot.lane.b32.xlu0 %v143, 104
    %v985 = vpop.permute.xlu0 %984
    %986 = vrot.lane.b32.xlu0 %v148, 104
    %v987 = vpop.permute.xlu0 %986
    %988 = vrot.lane.b32.xlu0 %v153, 104
    %v989 = vpop.permute.xlu0 %988
    %990 = vrot.lane.b32.xlu0 %v158, 104
    %v991 = vpop.permute.xlu0 %990
    %992 = vrot.lane.b32.xlu0 %v163, 104
    %v993 = vpop.permute.xlu0 %992
    %994 = vrot.lane.b32.xlu0 %v168, 104
    %v995 = vpop.permute.xlu0 %994
    %v996 = vsel %vm793, %v981, 0
    %v998 = vsel %vm793, %v983, 0
    %v1000 = vsel %vm793, %v985, 0
    %v1002 = vsel %vm793, %v987, 0
    %v1004 = vsel %vm793, %v989, 0
    %v1006 = vsel %vm793, %v991, 0
    %v1008 = vsel %vm793, %v993, 0
    %v1010 = vsel %vm793, %v995, 0
    %v1013 = vsel %vm62, %v966, 0
    %1015 = vmatprep.subr.mxu0 0.0
    %1016 = vmatpush1.msra.mxu0 %v1013
    %1017 = vmatprep.subr.mxu0 0.0
    %1018 = vmatpush1.msra.mxu0 0.0
    %1019 = vmatprep.subr.mxu0 0.0
    %1020 = vmatpush1.msra.mxu0 0.0
    %1021 = vmatprep.subr.mxu0 0.0
    %1022 = vmatpush1.msra.mxu0 0.0
    %1023 = vmatprep.subr.mxu0 0.0
    %1024 = vmatpush1.msra.mxu0 0.0
    %1025 = vmatprep.subr.mxu0 0.0
    %1026 = vmatpush1.msra.mxu0 0.0
    %1027 = vmatprep.subr.mxu0 0.0
    %1028 = vmatpush1.msra.mxu0 0.0
    %1029 = vmatprep.subr.mxu0 0.0
    %1030 = vmatpush1.msra.mxu0 0.0
    %1031 = vmatprep.subr.mxu0 0.0
    %1032 = vmatpush1.msra.mxu0 0.0
    %1033 = vmatprep.subr.mxu0 0.0
    %1034 = vmatpush1.msra.mxu0 0.0
    %1035 = vmatprep.subr.mxu0 0.0
    %1036 = vmatpush1.msra.mxu0 0.0
    %1037 = vmatprep.subr.mxu0 0.0
    %1038 = vmatpush1.msra.mxu0 0.0
    %1039 = vmatprep.subr.mxu0 0.0
    %1040 = vmatpush1.msra.mxu0 0.0
    %1041 = vmatprep.subr.mxu0 0.0
    %1042 = vmatpush1.msra.mxu0 0.0
    %1043 = vmatprep.subr.mxu0 0.0
    %1044 = vmatpush1.msra.mxu0 0.0
    %1045 = vmatprep.subr.mxu0 0.0
    %1046 = vmatpush1.msra.mxu0 0.0
    %1047 = vmatprep.subr.mxu0 0.0
    %1048 = vmatpush1.msra.mxu0 0.0
    %1049 = vmatprep.subr.mxu0 0.0
    %1050 = vmatpush1.msra.mxu0 0.0
    %1051 = vmatprep.subr.mxu0 0.0
    %1052 = vmatpush1.msra.mxu0 0.0
    %1053 = vmatprep.subr.mxu0 0.0
    %1054 = vmatpush1.msra.mxu0 0.0
    %1055 = vmatprep.subr.mxu0 0.0
    %1056 = vmatpush1.msra.mxu0 0.0
    %1057 = vmatprep.subr.mxu0 0.0
    %1058 = vmatpush1.msra.mxu0 0.0
    %1059 = vmatprep.subr.mxu0 0.0
    %1060 = vmatpush1.msra.mxu0 0.0
    %1061 = vmatprep.subr.mxu0 0.0
    %1062 = vmatpush1.msra.mxu0 0.0
    %1063 = vmatprep.subr.mxu0 0.0
    %1064 = vmatpush1.msra.mxu0 0.0
    %1065 = vmatprep.subr.mxu0 0.0
    %1066 = vmatpush1.msra.mxu0 0.0
    %1067 = vmatprep.subr.mxu0 0.0
    %1068 = vmatpush1.msra.mxu0 0.0
    %1069 = vmatprep.subr.mxu0 0.0
    %1070 = vmatpush1.msra.mxu0 0.0
    %1071 = vmatprep.subr.mxu0 0.0
    %1072 = vmatpush1.msra.mxu0 0.0
    %1073 = vmatprep.subr.mxu0 0.0
    %1074 = vmatpush1.msra.mxu0 0.0
    %1075 = vmatprep.subr.mxu0 0.0
    %1076 = vmatpush1.msra.mxu0 0.0
    %1077 = vmatprep.subr.mxu0 0.0
    %1078 = vmatpush1.msra.mxu0 0.0
    %1079 = vmatprep.mubr.f32.mxu0 0.0
    %1080 = vmatmul.mubr.f32.gmra.mrb[0].mxu0 %v996
    %v1081 = vpop.f32.mrb[0].mxu0
    %v1082 = vadd.f32 %v971, %v1081
    %v1083 = vpop.f32.mrb[0].mxu0
    %1084 = vmatprep.mubr.f32.mxu0 0.0
    %1085 = vmatmul.mubr.f32.gmra.mrb[0].mxu0 %v998
    %v1086 = vpop.f32.mrb[0].mxu0
    %v1087 = vadd.f32 %v971, %v1086
    %v1088 = vpop.f32.mrb[0].mxu0
    %1089 = vmatprep.mubr.f32.mxu0 0.0
    %1090 = vmatmul.mubr.f32.gmra.mrb[0].mxu0 %v1000
    %v1091 = vpop.f32.mrb[0].mxu0
    %v1092 = vadd.f32 %v971, %v1091
    %v1093 = vpop.f32.mrb[0].mxu0
    %1094 = vmatprep.mubr.f32.mxu0 0.0
    %1095 = vmatmul.mubr.f32.gmra.mrb[0].mxu0 %v1002
    %v1096 = vpop.f32.mrb[0].mxu0
    %v1097 = vadd.f32 %v971, %v1096
    %v1098 = vpop.f32.mrb[0].mxu0
    %1099 = vmatprep.mubr.f32.mxu0 0.0
    %1100 = vmatmul.mubr.f32.gmra.mrb[0].mxu0 %v1004
    %v1101 = vpop.f32.mrb[0].mxu0
    %v1102 = vadd.f32 %v971, %v1101
    %v1103 = vpop.f32.mrb[0].mxu0
    %1104 = vmatprep.mubr.f32.mxu0 0.0
    %1105 = vmatmul.mubr.f32.gmra.mrb[0].mxu0 %v1006
    %v1106 = vpop.f32.mrb[0].mxu0
    %v1107 = vadd.f32 %v971, %v1106
    %v1108 = vpop.f32.mrb[0].mxu0
    %1109 = vmatprep.mubr.f32.mxu0 0.0
    %1110 = vmatmul.mubr.f32.gmra.mrb[0].mxu0 %v1008
    %v1111 = vpop.f32.mrb[0].mxu0
    %v1112 = vadd.f32 %v971, %v1111
    %v1113 = vpop.f32.mrb[0].mxu0
    %1114 = vmatprep.mubr.f32.mxu0 0.0
    %1115 = vmatmul.mubr.f32.gmra.mrb[0].mxu0 %v1010
    %v1116 = vpop.f32.mrb[0].mxu0
    %v1117 = vadd.f32 %v971, %v1116
    %v1118 = vpop.f32.mrb[0].mxu0
    %1119 = vdwg.mxu0
    %v1120 = vmul.f32 %v1082, 0.5
    %v1121 = vmul.f32 %v1087, 0.5
    %v1122 = vmul.f32 %v1092, 0.5
    %v1123 = vmul.f32 %v1097, 0.5
    %v1124 = vmul.f32 %v1102, 0.5
    %v1125 = vmul.f32 %v1107, 0.5
    %v1126 = vmul.f32 %v1112, 0.5
    %v1127 = vmul.f32 %v1117, 0.5
    %v1128 = vmul.f32 %v1082, 0.044715
    %v1129 = vmul.f32 %v1087, 0.044715
    %v1130 = vmul.f32 %v1092, 0.044715
    %v1131 = vmul.f32 %v1097, 0.044715
    %v1132 = vmul.f32 %v1102, 0.044715
    %v1133 = vmul.f32 %v1107, 0.044715
    %v1134 = vmul.f32 %v1112, 0.044715
    %v1135 = vmul.f32 %v1117, 0.044715
    %v1136 = vmul.f32 %v1128, %v1082
    %v1137 = vmul.f32 %v1129, %v1087
    %v1138 = vmul.f32 %v1130, %v1092
    %v1139 = vmul.f32 %v1131, %v1097
    %v1140 = vmul.f32 %v1132, %v1102
    %v1141 = vmul.f32 %v1133, %v1107
    %v1142 = vmul.f32 %v1134, %v1112
    %v1143 = vmul.f32 %v1135, %v1117
    %v1144 = vmul.f32 %v1136, %v1082
    %v1145 = vmul.f32 %v1137, %v1087
    %v1146 = vmul.f32 %v1138, %v1092
    %v1147 = vmul.f32 %v1139, %v1097
    %v1148 = vmul.f32 %v1140, %v1102
    %v1149 = vmul.f32 %v1141, %v1107
    %v1150 = vmul.f32 %v1142, %v1112
    %v1151 = vmul.f32 %v1143, %v1117
    %v1152 = vadd.f32 %v1082, %v1144
    %v1153 = vadd.f32 %v1087, %v1145
    %v1154 = vadd.f32 %v1092, %v1146
    %v1155 = vadd.f32 %v1097, %v1147
    %v1156 = vadd.f32 %v1102, %v1148
    %v1157 = vadd.f32 %v1107, %v1149
    %v1158 = vadd.f32 %v1112, %v1150
    %v1159 = vadd.f32 %v1117, %v1151
    %v1160 = vmul.f32 %v1152, 0.7978846
    %v1161 = vmul.f32 %v1153, 0.7978846
    %v1162 = vmul.f32 %v1154, 0.7978846
    %v1163 = vmul.f32 %v1155, 0.7978846
    %v1164 = vmul.f32 %v1156, 0.7978846
    %v1165 = vmul.f32 %v1157, 0.7978846
    %v1166 = vmul.f32 %v1158, 0.7978846
    %v1167 = vmul.f32 %v1159, 0.7978846
    %v1168 = vtanh.pop %v1160
    %v1169 = vtanh.pop %v1161
    %v1170 = vtanh.pop %v1162
    %v1171 = vtanh.pop %v1163
    %v1172 = vtanh.pop %v1164
    %v1173 = vtanh.pop %v1165
    %v1174 = vtanh.pop %v1166
    %v1175 = vtanh.pop %v1167
    %v1176 = vadd.f32 %v1168, 1.0
    %v1177 = vadd.f32 %v1169, 1.0
    %v1178 = vadd.f32 %v1170, 1.0
    %v1179 = vadd.f32 %v1171, 1.0
    %v1180 = vadd.f32 %v1172, 1.0
    %v1181 = vadd.f32 %v1173, 1.0
    %v1182 = vadd.f32 %v1174, 1.0
    %v1183 = vadd.f32 %v1175, 1.0
    %v1184 = vmul.f32 %v1120, %v1176
    %v1185 = vmul.f32 %v1121, %v1177
    %v1186 = vmul.f32 %v1122, %v1178
    %v1187 = vmul.f32 %v1123, %v1179
    %v1188 = vmul.f32 %v1124, %v1180
    %v1189 = vmul.f32 %v1125, %v1181
    %v1190 = vmul.f32 %v1126, %v1182
    %v1191 = vmul.f32 %v1127, %v1183
    %v1192 = vld [vmem:[#allocation2 + $0x78] sm:$0xff]
    %v1193 = vld [vmem:[#allocation2 + $0x80] sm:$0x1]
    %v1194 = vlaneseq
    %v1195 = vshrl.u32 %v1194, 7
    %v1196 = vsub.s32 0, %v1195
    %v1197 = vrot.slane %v1193, %v1196
    %v1199 = vsel %vm394, %v1184, 0
    %v1202 = vsel %vm394, %v1185, 0
    %v1205 = vsel %vm394, %v1186, 0
    %v1208 = vsel %vm394, %v1187, 0
    %v1211 = vsel %vm394, %v1188, 0
    %v1214 = vsel %vm394, %v1189, 0
    %v1217 = vsel %vm394, %v1190, 0
    %v1220 = vsel %vm394, %v1191, 0
    %1222 = vmatprep.subr.mxu0 0.0
    %1223 = vmatpush1.msra.mxu0 %v1192
    %1224 = vmatprep.subr.mxu0 0.0
    %1225 = vmatpush1.msra.mxu0 0.0
    %1226 = vmatprep.subr.mxu0 0.0
    %1227 = vmatpush1.msra.mxu0 0.0
    %1228 = vmatprep.subr.mxu0 0.0
    %1229 = vmatpush1.msra.mxu0 0.0
    %1230 = vmatprep.subr.mxu0 0.0
    %1231 = vmatpush1.msra.mxu0 0.0
    %1232 = vmatprep.subr.mxu0 0.0
    %1233 = vmatpush1.msra.mxu0 0.0
    %1234 = vmatprep.subr.mxu0 0.0
    %1235 = vmatpush1.msra.mxu0 0.0
    %1236 = vmatprep.subr.mxu0 0.0
    %1237 = vmatpush1.msra.mxu0 0.0
    %1238 = vmatprep.subr.mxu0 0.0
    %1239 = vmatpush1.msra.mxu0 0.0
    %1240 = vmatprep.subr.mxu0 0.0
    %1241 = vmatpush1.msra.mxu0 0.0
    %1242 = vmatprep.subr.mxu0 0.0
    %1243 = vmatpush1.msra.mxu0 0.0
    %1244 = vmatprep.subr.mxu0 0.0
    %1245 = vmatpush1.msra.mxu0 0.0
    %1246 = vmatprep.subr.mxu0 0.0
    %1247 = vmatpush1.msra.mxu0 0.0
    %1248 = vmatprep.subr.mxu0 0.0
    %1249 = vmatpush1.msra.mxu0 0.0
    %1250 = vmatprep.subr.mxu0 0.0
    %1251 = vmatpush1.msra.mxu0 0.0
    %1252 = vmatprep.subr.mxu0 0.0
    %1253 = vmatpush1.msra.mxu0 0.0
    %1254 = vmatprep.subr.mxu0 0.0
    %1255 = vmatpush1.msra.mxu0 0.0
    %1256 = vmatprep.subr.mxu0 0.0
    %1257 = vmatpush1.msra.mxu0 0.0
    %1258 = vmatprep.subr.mxu0 0.0
    %1259 = vmatpush1.msra.mxu0 0.0
    %1260 = vmatprep.subr.mxu0 0.0
    %1261 = vmatpush1.msra.mxu0 0.0
    %1262 = vmatprep.subr.mxu0 0.0
    %1263 = vmatpush1.msra.mxu0 0.0
    %1264 = vmatprep.subr.mxu0 0.0
    %1265 = vmatpush1.msra.mxu0 0.0
    %1266 = vmatprep.subr.mxu0 0.0
    %1267 = vmatpush1.msra.mxu0 0.0
    %1268 = vmatprep.subr.mxu0 0.0
    %1269 = vmatpush1.msra.mxu0 0.0
    %1270 = vmatprep.subr.mxu0 0.0
    %1271 = vmatpush1.msra.mxu0 0.0
    %1272 = vmatprep.subr.mxu0 0.0
    %1273 = vmatpush1.msra.mxu0 0.0
    %1274 = vmatprep.subr.mxu0 0.0
    %1275 = vmatpush1.msra.mxu0 0.0
    %1276 = vmatprep.subr.mxu0 0.0
    %1277 = vmatpush1.msra.mxu0 0.0
    %1278 = vmatprep.subr.mxu0 0.0
    %1279 = vmatpush1.msra.mxu0 0.0
    %1280 = vmatprep.subr.mxu0 0.0
    %1281 = vmatpush1.msra.mxu0 0.0
    %1282 = vmatprep.subr.mxu0 0.0
    %1283 = vmatpush1.msra.mxu0 0.0
    %1284 = vmatprep.subr.mxu0 0.0
    %1285 = vmatpush1.msra.mxu0 0.0
    %1286 = vmatprep.mubr.f32.mxu0 0.0
    %1287 = vmatmul.mubr.f32.gmra.mrb[0].mxu0 %v1199
    %v1288 = vpop.f32.mrb[0].mxu0
    %v1289 = vadd.f32 %v1197, %v1288
    %v1290 = vpop.f32.mrb[0].mxu0
    %1291 = vmatprep.mubr.f32.mxu0 0.0
    %1292 = vmatmul.mubr.f32.gmra.mrb[0].mxu0 %v1202
    %v1293 = vpop.f32.mrb[0].mxu0
    %v1294 = vadd.f32 %v1197, %v1293
    %v1295 = vpop.f32.mrb[0].mxu0
    %1296 = vmatprep.mubr.f32.mxu0 0.0
    %1297 = vmatmul.mubr.f32.gmra.mrb[0].mxu0 %v1205
    %v1298 = vpop.f32.mrb[0].mxu0
    %v1299 = vadd.f32 %v1197, %v1298
    %v1300 = vpop.f32.mrb[0].mxu0
    %1301 = vmatprep.mubr.f32.mxu0 0.0
    %1302 = vmatmul.mubr.f32.gmra.mrb[0].mxu0 %v1208
    %v1303 = vpop.f32.mrb[0].mxu0
    %v1304 = vadd.f32 %v1197, %v1303
    %v1305 = vpop.f32.mrb[0].mxu0
    %1306 = vmatprep.mubr.f32.mxu0 0.0
    %1307 = vmatmul.mubr.f32.gmra.mrb[0].mxu0 %v1211
    %v1308 = vpop.f32.mrb[0].mxu0
    %v1309 = vadd.f32 %v1197, %v1308
    %v1310 = vpop.f32.mrb[0].mxu0
    %1311 = vmatprep.mubr.f32.mxu0 0.0
    %1312 = vmatmul.mubr.f32.gmra.mrb[0].mxu0 %v1214
    %v1313 = vpop.f32.mrb[0].mxu0
    %v1314 = vadd.f32 %v1197, %v1313
    %v1315 = vpop.f32.mrb[0].mxu0
    %1316 = vmatprep.mubr.f32.mxu0 0.0
    %1317 = vmatmul.mubr.f32.gmra.mrb[0].mxu0 %v1217
    %v1318 = vpop.f32.mrb[0].mxu0
    %v1319 = vadd.f32 %v1197, %v1318
    %v1320 = vpop.f32.mrb[0].mxu0
    %1321 = vmatprep.mubr.f32.mxu0 0.0
    %1322 = vmatmul.mubr.f32.gmra.mrb[0].mxu0 %v1220
    %v1323 = vpop.f32.mrb[0].mxu0
    %v1324 = vadd.f32 %v1197, %v1323
    %v1325 = vpop.f32.mrb[0].mxu0
    %1326 = vdwg.mxu0
    %1335 = vrot.lane.b32.xlu0 %v1289, 16
    %v1336 = vpop.permute.xlu0 %1335
    %1337 = vrot.lane.b32.xlu0 %v1294, 16
    %v1338 = vpop.permute.xlu0 %1337
    %1339 = vrot.lane.b32.xlu0 %v1299, 16
    %v1340 = vpop.permute.xlu0 %1339
    %1341 = vrot.lane.b32.xlu0 %v1304, 16
    %v1342 = vpop.permute.xlu0 %1341
    %1343 = vrot.lane.b32.xlu0 %v1309, 16
    %v1344 = vpop.permute.xlu0 %1343
    %1345 = vrot.lane.b32.xlu0 %v1314, 16
    %v1346 = vpop.permute.xlu0 %1345
    %1347 = vrot.lane.b32.xlu0 %v1319, 16
    %v1348 = vpop.permute.xlu0 %1347
    %1349 = vrot.lane.b32.xlu0 %v1324, 16
    %v1350 = vpop.permute.xlu0 %1349
    %v1359 = vadd.f32 %v133, %v1336
    %v1360 = vadd.f32 %v138, %v1338
    %v1361 = vadd.f32 %v143, %v1340
    %v1362 = vadd.f32 %v148, %v1342
    %v1363 = vadd.f32 %v153, %v1344
    %v1364 = vadd.f32 %v158, %v1346
    %v1365 = vadd.f32 %v163, %v1348
    %v1366 = vadd.f32 %v168, %v1350
    %v1367 = vld [vmem:[#allocation2 + $0x88] sm:$0xff]
    %v1368 = vld [vmem:[#allocation2 + $0x90] sm:$0x1]
    %v1369 = vlaneseq
    %v1370 = vshrl.u32 %v1369, 7
    %v1371 = vsub.s32 0, %v1370
    %v1372 = vrot.slane %v1368, %v1371
    %1381 = vrot.lane.b32.xlu0 %v1359, 112
    %v1382 = vpop.permute.xlu0 %1381
    %1383 = vrot.lane.b32.xlu0 %v1360, 112
    %v1384 = vpop.permute.xlu0 %1383
    %1385 = vrot.lane.b32.xlu0 %v1361, 112
    %v1386 = vpop.permute.xlu0 %1385
    %1387 = vrot.lane.b32.xlu0 %v1362, 112
    %v1388 = vpop.permute.xlu0 %1387
    %1389 = vrot.lane.b32.xlu0 %v1363, 112
    %v1390 = vpop.permute.xlu0 %1389
    %1391 = vrot.lane.b32.xlu0 %v1364, 112
    %v1392 = vpop.permute.xlu0 %1391
    %1393 = vrot.lane.b32.xlu0 %v1365, 112
    %v1394 = vpop.permute.xlu0 %1393
    %1395 = vrot.lane.b32.xlu0 %v1366, 112
    %v1396 = vpop.permute.xlu0 %1395
    %v1397 = vsel %vm394, %v1382, 0
    %v1399 = vsel %vm394, %v1384, 0
    %v1401 = vsel %vm394, %v1386, 0
    %v1403 = vsel %vm394, %v1388, 0
    %v1405 = vsel %vm394, %v1390, 0
    %v1407 = vsel %vm394, %v1392, 0
    %v1409 = vsel %vm394, %v1394, 0
    %v1411 = vsel %vm394, %v1396, 0
    %1413 = vmatprep.subr.mxu0 0.0
    %1414 = vmatpush1.msra.mxu0 %v1367
    %1415 = vmatprep.subr.mxu0 0.0
    %1416 = vmatpush1.msra.mxu0 0.0
    %1417 = vmatprep.subr.mxu0 0.0
    %1418 = vmatpush1.msra.mxu0 0.0
    %1419 = vmatprep.subr.mxu0 0.0
    %1420 = vmatpush1.msra.mxu0 0.0
    %1421 = vmatprep.subr.mxu0 0.0
    %1422 = vmatpush1.msra.mxu0 0.0
    %1423 = vmatprep.subr.mxu0 0.0
    %1424 = vmatpush1.msra.mxu0 0.0
    %1425 = vmatprep.subr.mxu0 0.0
    %1426 = vmatpush1.msra.mxu0 0.0
    %1427 = vmatprep.subr.mxu0 0.0
    %1428 = vmatpush1.msra.mxu0 0.0
    %1429 = vmatprep.subr.mxu0 0.0
    %1430 = vmatpush1.msra.mxu0 0.0
    %1431 = vmatprep.subr.mxu0 0.0
    %1432 = vmatpush1.msra.mxu0 0.0
    %1433 = vmatprep.subr.mxu0 0.0
    %1434 = vmatpush1.msra.mxu0 0.0
    %1435 = vmatprep.subr.mxu0 0.0
    %1436 = vmatpush1.msra.mxu0 0.0
    %1437 = vmatprep.subr.mxu0 0.0
    %1438 = vmatpush1.msra.mxu0 0.0
    %1439 = vmatprep.subr.mxu0 0.0
    %1440 = vmatpush1.msra.mxu0 0.0
    %1441 = vmatprep.subr.mxu0 0.0
    %1442 = vmatpush1.msra.mxu0 0.0
    %1443 = vmatprep.subr.mxu0 0.0
    %1444 = vmatpush1.msra.mxu0 0.0
    %1445 = vmatprep.subr.mxu0 0.0
    %1446 = vmatpush1.msra.mxu0 0.0
    %1447 = vmatprep.subr.mxu0 0.0
    %1448 = vmatpush1.msra.mxu0 0.0
    %1449 = vmatprep.subr.mxu0 0.0
    %1450 = vmatpush1.msra.mxu0 0.0
    %1451 = vmatprep.subr.mxu0 0.0
    %1452 = vmatpush1.msra.mxu0 0.0
    %1453 = vmatprep.subr.mxu0 0.0
    %1454 = vmatpush1.msra.mxu0 0.0
    %1455 = vmatprep.subr.mxu0 0.0
    %1456 = vmatpush1.msra.mxu0 0.0
    %1457 = vmatprep.subr.mxu0 0.0
    %1458 = vmatpush1.msra.mxu0 0.0
    %1459 = vmatprep.subr.mxu0 0.0
    %1460 = vmatpush1.msra.mxu0 0.0
    %1461 = vmatprep.subr.mxu0 0.0
    %1462 = vmatpush1.msra.mxu0 0.0
    %1463 = vmatprep.subr.mxu0 0.0
    %1464 = vmatpush1.msra.mxu0 0.0
    %1465 = vmatprep.subr.mxu0 0.0
    %1466 = vmatpush1.msra.mxu0 0.0
    %1467 = vmatprep.subr.mxu0 0.0
    %1468 = vmatpush1.msra.mxu0 0.0
    %1469 = vmatprep.subr.mxu0 0.0
    %1470 = vmatpush1.msra.mxu0 0.0
    %1471 = vmatprep.subr.mxu0 0.0
    %1472 = vmatpush1.msra.mxu0 0.0
    %1473 = vmatprep.subr.mxu0 0.0
    %1474 = vmatpush1.msra.mxu0 0.0
    %1475 = vmatprep.subr.mxu0 0.0
    %1476 = vmatpush1.msra.mxu0 0.0
    %1477 = vmatprep.mubr.f32.mxu0 0.0
    %1478 = vmatmul.mubr.f32.gmra.mrb[0].mxu0 %v1397
    %v1479 = vpop.f32.mrb[0].mxu0
    %v1480 = vadd.f32 %v1372, %v1479
    %v1481 = vpop.f32.mrb[0].mxu0
    %1482 = vmatprep.mubr.f32.mxu0 0.0
    %1483 = vmatmul.mubr.f32.gmra.mrb[0].mxu0 %v1399
    %v1484 = vpop.f32.mrb[0].mxu0
    %v1485 = vadd.f32 %v1372, %v1484
    %v1486 = vpop.f32.mrb[0].mxu0
    %1487 = vmatprep.mubr.f32.mxu0 0.0
    %1488 = vmatmul.mubr.f32.gmra.mrb[0].mxu0 %v1401
    %v1489 = vpop.f32.mrb[0].mxu0
    %v1490 = vadd.f32 %v1372, %v1489
    %v1491 = vpop.f32.mrb[0].mxu0
    %1492 = vmatprep.mubr.f32.mxu0 0.0
    %1493 = vmatmul.mubr.f32.gmra.mrb[0].mxu0 %v1403
    %v1494 = vpop.f32.mrb[0].mxu0
    %v1495 = vadd.f32 %v1372, %v1494
    %v1496 = vpop.f32.mrb[0].mxu0
    %1497 = vmatprep.mubr.f32.mxu0 0.0
    %1498 = vmatmul.mubr.f32.gmra.mrb[0].mxu0 %v1405
    %v1499 = vpop.f32.mrb[0].mxu0
    %v1500 = vadd.f32 %v1372, %v1499
    %v1501 = vpop.f32.mrb[0].mxu0
    %1502 = vmatprep.mubr.f32.mxu0 0.0
    %1503 = vmatmul.mubr.f32.gmra.mrb[0].mxu0 %v1407
    %v1504 = vpop.f32.mrb[0].mxu0
    %v1505 = vadd.f32 %v1372, %v1504
    %v1506 = vpop.f32.mrb[0].mxu0
    %1507 = vmatprep.mubr.f32.mxu0 0.0
    %1508 = vmatmul.mubr.f32.gmra.mrb[0].mxu0 %v1409
    %v1509 = vpop.f32.mrb[0].mxu0
    %v1510 = vadd.f32 %v1372, %v1509
    %v1511 = vpop.f32.mrb[0].mxu0
    %1512 = vmatprep.mubr.f32.mxu0 0.0
    %1513 = vmatmul.mubr.f32.gmra.mrb[0].mxu0 %v1411
    %v1514 = vpop.f32.mrb[0].mxu0
    %v1515 = vadd.f32 %v1372, %v1514
    %v1516 = vpop.f32.mrb[0].mxu0
    %1517 = vdwg.mxu0
    %v1518 = vmul.f32 %v1480, 0.5
    %v1519 = vmul.f32 %v1485, 0.5
    %v1520 = vmul.f32 %v1490, 0.5
    %v1521 = vmul.f32 %v1495, 0.5
    %v1522 = vmul.f32 %v1500, 0.5
    %v1523 = vmul.f32 %v1505, 0.5
    %v1524 = vmul.f32 %v1510, 0.5
    %v1525 = vmul.f32 %v1515, 0.5
    %v1526 = vmul.f32 %v1480, 0.044715
    %v1527 = vmul.f32 %v1485, 0.044715
    %v1528 = vmul.f32 %v1490, 0.044715
    %v1529 = vmul.f32 %v1495, 0.044715
    %v1530 = vmul.f32 %v1500, 0.044715
    %v1531 = vmul.f32 %v1505, 0.044715
    %v1532 = vmul.f32 %v1510, 0.044715
    %v1533 = vmul.f32 %v1515, 0.044715
    %v1534 = vmul.f32 %v1526, %v1480
    %v1535 = vmul.f32 %v1527, %v1485
    %v1536 = vmul.f32 %v1528, %v1490
    %v1537 = vmul.f32 %v1529, %v1495
    %v1538 = vmul.f32 %v1530, %v1500
    %v1539 = vmul.f32 %v1531, %v1505
    %v1540 = vmul.f32 %v1532, %v1510
    %v1541 = vmul.f32 %v1533, %v1515
    %v1542 = vmul.f32 %v1534, %v1480
    %v1543 = vmul.f32 %v1535, %v1485
    %v1544 = vmul.f32 %v1536, %v1490
    %v1545 = vmul.f32 %v1537, %v1495
    %v1546 = vmul.f32 %v1538, %v1500
    %v1547 = vmul.f32 %v1539, %v1505
    %v1548 = vmul.f32 %v1540, %v1510
    %v1549 = vmul.f32 %v1541, %v1515
    %v1550 = vadd.f32 %v1480, %v1542
    %v1551 = vadd.f32 %v1485, %v1543
    %v1552 = vadd.f32 %v1490, %v1544
    %v1553 = vadd.f32 %v1495, %v1545
    %v1554 = vadd.f32 %v1500, %v1546
    %v1555 = vadd.f32 %v1505, %v1547
    %v1556 = vadd.f32 %v1510, %v1548
    %v1557 = vadd.f32 %v1515, %v1549
    %v1558 = vmul.f32 %v1550, 0.7978846
    %v1559 = vmul.f32 %v1551, 0.7978846
    %v1560 = vmul.f32 %v1552, 0.7978846
    %v1561 = vmul.f32 %v1553, 0.7978846
    %v1562 = vmul.f32 %v1554, 0.7978846
    %v1563 = vmul.f32 %v1555, 0.7978846
    %v1564 = vmul.f32 %v1556, 0.7978846
    %v1565 = vmul.f32 %v1557, 0.7978846
    %v1566 = vtanh.pop %v1558
    %v1567 = vtanh.pop %v1559
    %v1568 = vtanh.pop %v1560
    %v1569 = vtanh.pop %v1561
    %v1570 = vtanh.pop %v1562
    %v1571 = vtanh.pop %v1563
    %v1572 = vtanh.pop %v1564
    %v1573 = vtanh.pop %v1565
    %v1574 = vadd.f32 %v1566, 1.0
    %v1575 = vadd.f32 %v1567, 1.0
    %v1576 = vadd.f32 %v1568, 1.0
    %v1577 = vadd.f32 %v1569, 1.0
    %v1578 = vadd.f32 %v1570, 1.0
    %v1579 = vadd.f32 %v1571, 1.0
    %v1580 = vadd.f32 %v1572, 1.0
    %v1581 = vadd.f32 %v1573, 1.0
    %v1582 = vmul.f32 %v1518, %v1574
    %v1583 = vmul.f32 %v1519, %v1575
    %v1584 = vmul.f32 %v1520, %v1576
    %v1585 = vmul.f32 %v1521, %v1577
    %v1586 = vmul.f32 %v1522, %v1578
    %v1587 = vmul.f32 %v1523, %v1579
    %v1588 = vmul.f32 %v1524, %v1580
    %v1589 = vmul.f32 %v1525, %v1581
    %v1590 = vld [vmem:[#allocation2 + $0x98] sm:$0xff]
    %v1591 = vld [vmem:[#allocation2 + $0xa0] sm:$0xff]
    %v1592 = vld [vmem:[#allocation2 + $0xa8] sm:$0x1]
    %v1593 = vlaneseq
    %v1594 = vshrl.u32 %v1593, 7
    %v1595 = vsub.s32 0, %v1594
    %v1596 = vrot.slane %v1592, %v1595
    %v1598 = vsel %vm186, %v1582, 0
    %v1601 = vsel %vm186, %v1583, 0
    %v1604 = vsel %vm186, %v1584, 0
    %v1607 = vsel %vm186, %v1585, 0
    %v1610 = vsel %vm186, %v1586, 0
    %v1613 = vsel %vm186, %v1587, 0
    %v1616 = vsel %vm186, %v1588, 0
    %v1619 = vsel %vm186, %v1589, 0
    %1621 = vmatprep.subr.mxu0 0.0
    %1622 = vmatpush1.msra.mxu0 %v1590
    %1623 = vmatprep.subr.mxu0 0.0
    %1624 = vmatpush1.msra.mxu0 %v1591
    %1625 = vmatprep.subr.mxu0 0.0
    %1626 = vmatpush1.msra.mxu0 0.0
    %1627 = vmatprep.subr.mxu0 0.0
    %1628 = vmatpush1.msra.mxu0 0.0
    %1629 = vmatprep.subr.mxu0 0.0
    %1630 = vmatpush1.msra.mxu0 0.0
    %1631 = vmatprep.subr.mxu0 0.0
    %1632 = vmatpush1.msra.mxu0 0.0
    %1633 = vmatprep.subr.mxu0 0.0
    %1634 = vmatpush1.msra.mxu0 0.0
    %1635 = vmatprep.subr.mxu0 0.0
    %1636 = vmatpush1.msra.mxu0 0.0
    %1637 = vmatprep.subr.mxu0 0.0
    %1638 = vmatpush1.msra.mxu0 0.0
    %1639 = vmatprep.subr.mxu0 0.0
    %1640 = vmatpush1.msra.mxu0 0.0
    %1641 = vmatprep.subr.mxu0 0.0
    %1642 = vmatpush1.msra.mxu0 0.0
    %1643 = vmatprep.subr.mxu0 0.0
    %1644 = vmatpush1.msra.mxu0 0.0
    %1645 = vmatprep.subr.mxu0 0.0
    %1646 = vmatpush1.msra.mxu0 0.0
    %1647 = vmatprep.subr.mxu0 0.0
    %1648 = vmatpush1.msra.mxu0 0.0
    %1649 = vmatprep.subr.mxu0 0.0
    %1650 = vmatpush1.msra.mxu0 0.0
    %1651 = vmatprep.subr.mxu0 0.0
    %1652 = vmatpush1.msra.mxu0 0.0
    %1653 = vmatprep.subr.mxu0 0.0
    %1654 = vmatpush1.msra.mxu0 0.0
    %1655 = vmatprep.subr.mxu0 0.0
    %1656 = vmatpush1.msra.mxu0 0.0
    %1657 = vmatprep.subr.mxu0 0.0
    %1658 = vmatpush1.msra.mxu0 0.0
    %1659 = vmatprep.subr.mxu0 0.0
    %1660 = vmatpush1.msra.mxu0 0.0
    %1661 = vmatprep.subr.mxu0 0.0
    %1662 = vmatpush1.msra.mxu0 0.0
    %1663 = vmatprep.subr.mxu0 0.0
    %1664 = vmatpush1.msra.mxu0 0.0
    %1665 = vmatprep.subr.mxu0 0.0
    %1666 = vmatpush1.msra.mxu0 0.0
    %1667 = vmatprep.subr.mxu0 0.0
    %1668 = vmatpush1.msra.mxu0 0.0
    %1669 = vmatprep.subr.mxu0 0.0
    %1670 = vmatpush1.msra.mxu0 0.0
    %1671 = vmatprep.subr.mxu0 0.0
    %1672 = vmatpush1.msra.mxu0 0.0
    %1673 = vmatprep.subr.mxu0 0.0
    %1674 = vmatpush1.msra.mxu0 0.0
    %1675 = vmatprep.subr.mxu0 0.0
    %1676 = vmatpush1.msra.mxu0 0.0
    %1677 = vmatprep.subr.mxu0 0.0
    %1678 = vmatpush1.msra.mxu0 0.0
    %1679 = vmatprep.subr.mxu0 0.0
    %1680 = vmatpush1.msra.mxu0 0.0
    %1681 = vmatprep.subr.mxu0 0.0
    %1682 = vmatpush1.msra.mxu0 0.0
    %1683 = vmatprep.subr.mxu0 0.0
    %1684 = vmatpush1.msra.mxu0 0.0
    %1685 = vmatprep.mubr.f32.mxu0 0.0
    %1686 = vmatmul.mubr.f32.gmra.mrb[0].mxu0 %v1598
    %v1687 = vpop.f32.mrb[0].mxu0
    %v1688 = vadd.f32 %v1596, %v1687
    %v1689 = vpop.f32.mrb[0].mxu0
    %1690 = vmatprep.mubr.f32.mxu0 0.0
    %1691 = vmatmul.mubr.f32.gmra.mrb[0].mxu0 %v1601
    %v1692 = vpop.f32.mrb[0].mxu0
    %v1693 = vadd.f32 %v1596, %v1692
    %v1694 = vpop.f32.mrb[0].mxu0
    %1695 = vmatprep.mubr.f32.mxu0 0.0
    %1696 = vmatmul.mubr.f32.gmra.mrb[0].mxu0 %v1604
    %v1697 = vpop.f32.mrb[0].mxu0
    %v1698 = vadd.f32 %v1596, %v1697
    %v1699 = vpop.f32.mrb[0].mxu0
    %1700 = vmatprep.mubr.f32.mxu0 0.0
    %1701 = vmatmul.mubr.f32.gmra.mrb[0].mxu0 %v1607
    %v1702 = vpop.f32.mrb[0].mxu0
    %v1703 = vadd.f32 %v1596, %v1702
    %v1704 = vpop.f32.mrb[0].mxu0
    %1705 = vmatprep.mubr.f32.mxu0 0.0
    %1706 = vmatmul.mubr.f32.gmra.mrb[0].mxu0 %v1610
    %v1707 = vpop.f32.mrb[0].mxu0
    %v1708 = vadd.f32 %v1596, %v1707
    %v1709 = vpop.f32.mrb[0].mxu0
    %1710 = vmatprep.mubr.f32.mxu0 0.0
    %1711 = vmatmul.mubr.f32.gmra.mrb[0].mxu0 %v1613
    %v1712 = vpop.f32.mrb[0].mxu0
    %v1713 = vadd.f32 %v1596, %v1712
    %v1714 = vpop.f32.mrb[0].mxu0
    %1715 = vmatprep.mubr.f32.mxu0 0.0
    %1716 = vmatmul.mubr.f32.gmra.mrb[0].mxu0 %v1616
    %v1717 = vpop.f32.mrb[0].mxu0
    %v1718 = vadd.f32 %v1596, %v1717
    %v1719 = vpop.f32.mrb[0].mxu0
    %1720 = vmatprep.mubr.f32.mxu0 0.0
    %1721 = vmatmul.mubr.f32.gmra.mrb[0].mxu0 %v1619
    %v1722 = vpop.f32.mrb[0].mxu0
    %v1723 = vadd.f32 %v1596, %v1722
    %v1724 = vpop.f32.mrb[0].mxu0
    %1725 = vdwg.mxu0
    %v1726 = vadd.f32 %v133, %v1688
    %v1727 = vadd.f32 %v138, %v1693
    %v1728 = vadd.f32 %v143, %v1698
    %v1729 = vadd.f32 %v148, %v1703
    %v1730 = vadd.f32 %v153, %v1708
    %v1731 = vadd.f32 %v158, %v1713
    %v1732 = vadd.f32 %v163, %v1718
    %v1733 = vadd.f32 %v168, %v1723
    %v1734 = vadd.f32 %v171, %v1726
    %v1735 = vadd.f32 %v172, %v1727
    %v1736 = vadd.f32 %v173, %v1728
    %v1737 = vadd.f32 %v174, %v1729
    %v1738 = vadd.f32 %v175, %v1730
    %v1739 = vadd.f32 %v176, %v1731
    %v1740 = vadd.f32 %v177, %v1732
    %v1741 = vadd.f32 %v178, %v1733
    %v1742 = vadd.f32 %v556, %v1359
    %v1743 = vadd.f32 %v557, %v1360
    %v1744 = vadd.f32 %v558, %v1361
    %v1745 = vadd.f32 %v559, %v1362
    %v1746 = vadd.f32 %v560, %v1363
    %v1747 = vadd.f32 %v561, %v1364
    %v1748 = vadd.f32 %v562, %v1365
    %v1749 = vadd.f32 %v563, %v1366
    %v1750 = vadd.f32 %v958, %v133
    %v1751 = vadd.f32 %v959, %v138
    %v1752 = vadd.f32 %v960, %v143
    %v1753 = vadd.f32 %v961, %v148
    %v1754 = vadd.f32 %v962, %v153
    %v1755 = vadd.f32 %v963, %v158
    %v1756 = vadd.f32 %v964, %v163
    %v1757 = vadd.f32 %v965, %v168
    %v1758 = vsel %vm186, %v1734, %v1742
    %v1759 = vsel %vm186, %v1735, %v1743
    %v1760 = vsel %vm186, %v1736, %v1744
    %v1761 = vsel %vm186, %v1737, %v1745
    %v1762 = vsel %vm186, %v1738, %v1746
    %v1763 = vsel %vm186, %v1739, %v1747
    %v1764 = vsel %vm186, %v1740, %v1748
    %v1765 = vsel %vm186, %v1741, %v1749
    %vm1766 = vcmask 195584
    %v1767 = vsel %vm1766, %v1758, %v1750
    %v1768 = vsel %vm1766, %v1759, %v1751
    %v1769 = vsel %vm1766, %v1760, %v1752
    %v1770 = vsel %vm1766, %v1761, %v1753
    %v1771 = vsel %vm1766, %v1762, %v1754
    %v1772 = vsel %vm1766, %v1763, %v1755
    %v1773 = vsel %vm1766, %v1764, %v1756
    %v1774 = vsel %vm1766, %v1765, %v1757
    %v1775 = vld [vmem:[#allocation2 + $0xb0] sm:$0xff]
    %v1776 = vld [vmem:[#allocation2 + $0xb8] sm:$0xff]
    %v1777 = vld [vmem:[#allocation2 + $0xc0] sm:$0xff]
    %v1778 = vld [vmem:[#allocation2 + $0xc8] sm:$0xff]
    %v1779 = vld [vmem:[#allocation2 + $0xd0] sm:$0xff]
    %v1780 = vld [vmem:[#allocation2 + $0xd8] sm:$0xff]
    %v1781 = vld [vmem:[#allocation2 + $0xe0] sm:$0xff]
    %v1782 = vld [vmem:[#allocation2 + $0xe8] sm:$0xff]
    %v1783 = vld [vmem:[#allocation2 + $0xf0] sm:$0xff]
    %v1784 = vld [vmem:[#allocation2 + $0xf8] sm:$0xff]
    %v1785 = vld [vmem:[#allocation2 + $0x100] sm:$0xff]
    %v1786 = vld [vmem:[#allocation2 + $0x108] sm:$0xff]
    %v1787 = vld [vmem:[#allocation2 + $0x110] sm:$0xff]
    %v1788 = vld [vmem:[#allocation2 + $0x118] sm:$0xff]
    %v1789 = vld [vmem:[#allocation2 + $0x120] sm:$0xff]
    %v1790 = vld [vmem:[#allocation2 + $0x128] sm:$0xff]
    %v1791 = vld [vmem:[#allocation2 + $0x130] sm:$0xff]
    %v1792 = vld [vmem:[#allocation2 + $0x138] sm:$0xff]
    %v1793 = vld [vmem:[#allocation2 + $0x140] sm:$0xff]
    %v1794 = vld [vmem:[#allocation2 + $0x148] sm:$0xff]
    %v1795 = vld [vmem:[#allocation2 + $0x150] sm:$0xff]
    %v1796 = vld [vmem:[#allocation2 + $0x158] sm:$0xff]
    %v1797 = vld [vmem:[#allocation2 + $0x160] sm:$0xff]
    %v1798 = vld [vmem:[#allocation2 + $0x168] sm:$0xff]
    %v1799 = vld [vmem:[#allocation2 + $0x170] sm:$0xff]
    %v1800 = vld [vmem:[#allocation2 + $0x178] sm:$0xff]
    %v1801 = vld [vmem:[#allocation2 + $0x180] sm:$0xff]
    %v1802 = vld [vmem:[#allocation2 + $0x188] sm:$0xff]
    %v1803 = vld [vmem:[#allocation2 + $0x190] sm:$0xff]
    %v1804 = vld [vmem:[#allocation2 + $0x198] sm:$0xff]
    %v1805 = vld [vmem:[#allocation2 + $0x1a0] sm:$0xff]
    %v1806 = vld [vmem:[#allocation2 + $0x1a8] sm:$0xff]
    %1808 = vset.pattern.permute.xlu0 0
    %1809 = vperm.xlu0 %1808, %v1791
    %v1810 = vpop.permute.xlu0 %1809
    %1813 = vset.pattern.permute.xlu0 0
    %1814 = vperm.xlu0 %1813, %v1792
    %v1815 = vpop.permute.xlu0 %1814
    %1818 = vset.pattern.permute.xlu0 0
    %1819 = vperm.xlu0 %1818, %v1793
    %v1820 = vpop.permute.xlu0 %1819
    %1823 = vset.pattern.permute.xlu0 0
    %1824 = vperm.xlu0 %1823, %v1794
    %v1825 = vpop.permute.xlu0 %1824
    %1828 = vset.pattern.permute.xlu0 0
    %1829 = vperm.xlu0 %1828, %v1795
    %v1830 = vpop.permute.xlu0 %1829
    %1833 = vset.pattern.permute.xlu0 0
    %1834 = vperm.xlu0 %1833, %v1796
    %v1835 = vpop.permute.xlu0 %1834
    %1838 = vset.pattern.permute.xlu0 0
    %1839 = vperm.xlu0 %1838, %v1797
    %v1840 = vpop.permute.xlu0 %1839
    %1843 = vset.pattern.permute.xlu0 0
    %1844 = vperm.xlu0 %1843, %v1798
    %v1845 = vpop.permute.xlu0 %1844
    %1848 = vset.pattern.permute.xlu0 0
    %1849 = vperm.xlu0 %1848, %v1799
    %v1850 = vpop.permute.xlu0 %1849
    %1853 = vset.pattern.permute.xlu0 0
    %1854 = vperm.xlu0 %1853, %v1800
    %v1855 = vpop.permute.xlu0 %1854
    %1858 = vset.pattern.permute.xlu0 0
    %1859 = vperm.xlu0 %1858, %v1801
    %v1860 = vpop.permute.xlu0 %1859
    %1863 = vset.pattern.permute.xlu0 0
    %1864 = vperm.xlu0 %1863, %v1802
    %v1865 = vpop.permute.xlu0 %1864
    %1868 = vset.pattern.permute.xlu0 0
    %1869 = vperm.xlu0 %1868, %v1803
    %v1870 = vpop.permute.xlu0 %1869
    %1873 = vset.pattern.permute.xlu0 0
    %1874 = vperm.xlu0 %1873, %v1804
    %v1875 = vpop.permute.xlu0 %1874
    %1878 = vset.pattern.permute.xlu0 0
    %1879 = vperm.xlu0 %1878, %v1805
    %v1880 = vpop.permute.xlu0 %1879
    %1883 = vset.pattern.permute.xlu0 0
    %1884 = vperm.xlu0 %1883, %v1806
    %v1885 = vpop.permute.xlu0 %1884
    %vm1887 = vcmask 523264
    %v1889 = vsel %vm1887, %v1775, 0
    %v1892 = vsel %vm1887, %v1776, 0
    %v1895 = vsel %vm1887, %v1777, 0
    %v1898 = vsel %vm1887, %v1778, 0
    %v1901 = vsel %vm1887, %v1779, 0
    %v1904 = vsel %vm1887, %v1780, 0
    %v1907 = vsel %vm1887, %v1781, 0
    %v1910 = vsel %vm1887, %v1782, 0
    %v1913 = vsel %vm1887, %v1783, 0
    %v1916 = vsel %vm1887, %v1784, 0
    %v1919 = vsel %vm1887, %v1785, 0
    %v1922 = vsel %vm1887, %v1786, 0
    %v1925 = vsel %vm1887, %v1787, 0
    %v1928 = vsel %vm1887, %v1788, 0
    %v1931 = vsel %vm1887, %v1789, 0
    %v1934 = vsel %vm1887, %v1790, 0
    %1936 = vmatprep.subr.mxu0 0.0
    %1937 = vmatpush1.msra.mxu0 %v1767
    %1938 = vmatprep.subr.mxu0 0.0
    %1939 = vmatpush1.msra.mxu0 %v1768
    %1940 = vmatprep.subr.mxu0 0.0
    %1941 = vmatpush1.msra.mxu0 %v1769
    %1942 = vmatprep.subr.mxu0 0.0
    %1943 = vmatpush1.msra.mxu0 %v1770
    %1944 = vmatprep.subr.mxu0 0.0
    %1945 = vmatpush1.msra.mxu0 %v1771
    %1946 = vmatprep.subr.mxu0 0.0
    %1947 = vmatpush1.msra.mxu0 %v1772
    %1948 = vmatprep.subr.mxu0 0.0
    %1949 = vmatpush1.msra.mxu0 %v1773
    %1950 = vmatprep.subr.mxu0 0.0
    %1951 = vmatpush1.msra.mxu0 %v1774
    %1952 = vmatprep.subr.mxu0 0.0
    %1953 = vmatpush1.msra.mxu0 0.0
    %1954 = vmatprep.subr.mxu0 0.0
    %1955 = vmatpush1.msra.mxu0 0.0
    %1956 = vmatprep.subr.mxu0 0.0
    %1957 = vmatpush1.msra.mxu0 0.0
    %1958 = vmatprep.subr.mxu0 0.0
    %1959 = vmatpush1.msra.mxu0 0.0
    %1960 = vmatprep.subr.mxu0 0.0
    %1961 = vmatpush1.msra.mxu0 0.0
    %1962 = vmatprep.subr.mxu0 0.0
    %1963 = vmatpush1.msra.mxu0 0.0
    %1964 = vmatprep.subr.mxu0 0.0
    %1965 = vmatpush1.msra.mxu0 0.0
    %1966 = vmatprep.subr.mxu0 0.0
    %1967 = vmatpush1.msra.mxu0 0.0
    %1968 = vmatprep.subr.mxu0 0.0
    %1969 = vmatpush1.msra.mxu0 0.0
    %1970 = vmatprep.subr.mxu0 0.0
    %1971 = vmatpush1.msra.mxu0 0.0
    %1972 = vmatprep.subr.mxu0 0.0
    %1973 = vmatpush1.msra.mxu0 0.0
    %1974 = vmatprep.subr.mxu0 0.0
    %1975 = vmatpush1.msra.mxu0 0.0
    %1976 = vmatprep.subr.mxu0 0.0
    %1977 = vmatpush1.msra.mxu0 0.0
    %1978 = vmatprep.subr.mxu0 0.0
    %1979 = vmatpush1.msra.mxu0 0.0
    %1980 = vmatprep.subr.mxu0 0.0
    %1981 = vmatpush1.msra.mxu0 0.0
    %1982 = vmatprep.subr.mxu0 0.0
    %1983 = vmatpush1.msra.mxu0 0.0
    %1984 = vmatprep.subr.mxu0 0.0
    %1985 = vmatpush1.msra.mxu0 0.0
    %1986 = vmatprep.subr.mxu0 0.0
    %1987 = vmatpush1.msra.mxu0 0.0
    %1988 = vmatprep.subr.mxu0 0.0
    %1989 = vmatpush1.msra.mxu0 0.0
    %1990 = vmatprep.subr.mxu0 0.0
    %1991 = vmatpush1.msra.mxu0 0.0
    %1992 = vmatprep.subr.mxu0 0.0
    %1993 = vmatpush1.msra.mxu0 0.0
    %1994 = vmatprep.subr.mxu0 0.0
    %1995 = vmatpush1.msra.mxu0 0.0
    %1996 = vmatprep.subr.mxu0 0.0
    %1997 = vmatpush1.msra.mxu0 0.0
    %1998 = vmatprep.subr.mxu0 0.0
    %1999 = vmatpush1.msra.mxu0 0.0
    %2000 = vmatprep.mubr.f32.mxu0 0.0
    %2001 = vmatmul.mubr.f32.gmra.mrb[0].mxu0 %v1889
    %v2002 = vpop.f32.mrb[0].mxu0
    %v2003 = vadd.f32 %v1810, %v2002
    %v2004 = vpop.f32.mrb[0].mxu0
    %2005 = vmatprep.mubr.f32.mxu0 0.0
    %2006 = vmatmul.mubr.f32.gmra.mrb[0].mxu0 %v1892
    %v2007 = vpop.f32.mrb[0].mxu0
    %v2008 = vadd.f32 %v1815, %v2007
    %v2009 = vpop.f32.mrb[0].mxu0
    %2010 = vmatprep.mubr.f32.mxu0 0.0
    %2011 = vmatmul.mubr.f32.gmra.mrb[0].mxu0 %v1895
    %v2012 = vpop.f32.mrb[0].mxu0
    %v2013 = vadd.f32 %v1820, %v2012
    %v2014 = vpop.f32.mrb[0].mxu0
    %2015 = vmatprep.mubr.f32.mxu0 0.0
    %2016 = vmatmul.mubr.f32.gmra.mrb[0].mxu0 %v1898
    %v2017 = vpop.f32.mrb[0].mxu0
    %v2018 = vadd.f32 %v1825, %v2017
    %v2019 = vpop.f32.mrb[0].mxu0
    %2020 = vmatprep.mubr.f32.mxu0 0.0
    %2021 = vmatmul.mubr.f32.gmra.mrb[0].mxu0 %v1901
    %v2022 = vpop.f32.mrb[0].mxu0
    %v2023 = vadd.f32 %v1830, %v2022
    %v2024 = vpop.f32.mrb[0].mxu0
    %2025 = vmatprep.mubr.f32.mxu0 0.0
    %2026 = vmatmul.mubr.f32.gmra.mrb[0].mxu0 %v1904
    %v2027 = vpop.f32.mrb[0].mxu0
    %v2028 = vadd.f32 %v1835, %v2027
    %v2029 = vpop.f32.mrb[0].mxu0
    %2030 = vmatprep.mubr.f32.mxu0 0.0
    %2031 = vmatmul.mubr.f32.gmra.mrb[0].mxu0 %v1907
    %v2032 = vpop.f32.mrb[0].mxu0
    %v2033 = vadd.f32 %v1840, %v2032
    %v2034 = vpop.f32.mrb[0].mxu0
    %2035 = vmatprep.mubr.f32.mxu0 0.0
    %2036 = vmatmul.mubr.f32.gmra.mrb[0].mxu0 %v1910
    %v2037 = vpop.f32.mrb[0].mxu0
    %v2038 = vadd.f32 %v1845, %v2037
    %v2039 = vpop.f32.mrb[0].mxu0
    %2040 = vmatprep.mubr.f32.mxu0 0.0
    %2041 = vmatmul.mubr.f32.gmra.mrb[0].mxu0 %v1913
    %v2042 = vpop.f32.mrb[0].mxu0
    %v2043 = vadd.f32 %v1850, %v2042
    %v2044 = vpop.f32.mrb[0].mxu0
    %2045 = vmatprep.mubr.f32.mxu0 0.0
    %2046 = vmatmul.mubr.f32.gmra.mrb[0].mxu0 %v1916
    %v2047 = vpop.f32.mrb[0].mxu0
    %v2048 = vadd.f32 %v1855, %v2047
    %v2049 = vpop.f32.mrb[0].mxu0
    %2050 = vmatprep.mubr.f32.mxu0 0.0
    %2051 = vmatmul.mubr.f32.gmra.mrb[0].mxu0 %v1919
    %v2052 = vpop.f32.mrb[0].mxu0
    %v2053 = vadd.f32 %v1860, %v2052
    %v2054 = vpop.f32.mrb[0].mxu0
    %2055 = vmatprep.mubr.f32.mxu0 0.0
    %2056 = vmatmul.mubr.f32.gmra.mrb[0].mxu0 %v1922
    %v2057 = vpop.f32.mrb[0].mxu0
    %v2058 = vadd.f32 %v1865, %v2057
    %v2059 = vpop.f32.mrb[0].mxu0
    %2060 = vmatprep.mubr.f32.mxu0 0.0
    %2061 = vmatmul.mubr.f32.gmra.mrb[0].mxu0 %v1925
    %v2062 = vpop.f32.mrb[0].mxu0
    %v2063 = vadd.f32 %v1870, %v2062
    %v2064 = vpop.f32.mrb[0].mxu0
    %2065 = vmatprep.mubr.f32.mxu0 0.0
    %2066 = vmatmul.mubr.f32.gmra.mrb[0].mxu0 %v1928
    %v2067 = vpop.f32.mrb[0].mxu0
    %v2068 = vadd.f32 %v1875, %v2067
    %v2069 = vpop.f32.mrb[0].mxu0
    %2070 = vmatprep.mubr.f32.mxu0 0.0
    %2071 = vmatmul.mubr.f32.gmra.mrb[0].mxu0 %v1931
    %v2072 = vpop.f32.mrb[0].mxu0
    %v2073 = vadd.f32 %v1880, %v2072
    %v2074 = vpop.f32.mrb[0].mxu0
    %2075 = vmatprep.mubr.f32.mxu0 0.0
    %2076 = vmatmul.mubr.f32.gmra.mrb[0].mxu0 %v1934
    %v2077 = vpop.f32.mrb[0].mxu0
    %v2078 = vadd.f32 %v1885, %v2077
    %v2079 = vpop.f32.mrb[0].mxu0
    %2080 = vdwg.mxu0
    %v2081 = vmul.f32 %v2003, 0.5
    %v2082 = vmul.f32 %v2008, 0.5
    %v2083 = vmul.f32 %v2013, 0.5
    %v2084 = vmul.f32 %v2018, 0.5
    %v2085 = vmul.f32 %v2023, 0.5
    %v2086 = vmul.f32 %v2028, 0.5
    %v2087 = vmul.f32 %v2033, 0.5
    %v2088 = vmul.f32 %v2038, 0.5
    %v2089 = vmul.f32 %v2043, 0.5
    %v2090 = vmul.f32 %v2048, 0.5
    %v2091 = vmul.f32 %v2053, 0.5
    %v2092 = vmul.f32 %v2058, 0.5
    %v2093 = vmul.f32 %v2063, 0.5
    %v2094 = vmul.f32 %v2068, 0.5
    %v2095 = vmul.f32 %v2073, 0.5
    %v2096 = vmul.f32 %v2078, 0.5
    %v2097 = vmul.f32 %v2003, 0.044715
    %v2098 = vmul.f32 %v2008, 0.044715
    %v2099 = vmul.f32 %v2013, 0.044715
    %v2100 = vmul.f32 %v2018, 0.044715
    %v2101 = vmul.f32 %v2023, 0.044715
    %v2102 = vmul.f32 %v2028, 0.044715
    %v2103 = vmul.f32 %v2033, 0.044715
    %v2104 = vmul.f32 %v2038, 0.044715
    %v2105 = vmul.f32 %v2043, 0.044715
    %v2106 = vmul.f32 %v2048, 0.044715
    %v2107 = vmul.f32 %v2053, 0.044715
    %v2108 = vmul.f32 %v2058, 0.044715
    %v2109 = vmul.f32 %v2063, 0.044715
    %v2110 = vmul.f32 %v2068, 0.044715
    %v2111 = vmul.f32 %v2073, 0.044715
    %v2112 = vmul.f32 %v2078, 0.044715
    %v2113 = vmul.f32 %v2097, %v2003
    %v2114 = vmul.f32 %v2098, %v2008
    %v2115 = vmul.f32 %v2099, %v2013
    %v2116 = vmul.f32 %v2100, %v2018
    %v2117 = vmul.f32 %v2101, %v2023
    %v2118 = vmul.f32 %v2102, %v2028
    %v2119 = vmul.f32 %v2103, %v2033
    %v2120 = vmul.f32 %v2104, %v2038
    %v2121 = vmul.f32 %v2105, %v2043
    %v2122 = vmul.f32 %v2106, %v2048
    %v2123 = vmul.f32 %v2107, %v2053
    %v2124 = vmul.f32 %v2108, %v2058
    %v2125 = vmul.f32 %v2109, %v2063
    %v2126 = vmul.f32 %v2110, %v2068
    %v2127 = vmul.f32 %v2111, %v2073
    %v2128 = vmul.f32 %v2112, %v2078
    %v2129 = vmul.f32 %v2113, %v2003
    %v2130 = vmul.f32 %v2114, %v2008
    %v2131 = vmul.f32 %v2115, %v2013
    %v2132 = vmul.f32 %v2116, %v2018
    %v2133 = vmul.f32 %v2117, %v2023
    %v2134 = vmul.f32 %v2118, %v2028
    %v2135 = vmul.f32 %v2119, %v2033
    %v2136 = vmul.f32 %v2120, %v2038
    %v2137 = vmul.f32 %v2121, %v2043
    %v2138 = vmul.f32 %v2122, %v2048
    %v2139 = vmul.f32 %v2123, %v2053
    %v2140 = vmul.f32 %v2124, %v2058
    %v2141 = vmul.f32 %v2125, %v2063
    %v2142 = vmul.f32 %v2126, %v2068
    %v2143 = vmul.f32 %v2127, %v2073
    %v2144 = vmul.f32 %v2128, %v2078
    %v2145 = vadd.f32 %v2003, %v2129
    %v2146 = vadd.f32 %v2008, %v2130
    %v2147 = vadd.f32 %v2013, %v2131
    %v2148 = vadd.f32 %v2018, %v2132
    %v2149 = vadd.f32 %v2023, %v2133
    %v2150 = vadd.f32 %v2028, %v2134
    %v2151 = vadd.f32 %v2033, %v2135
    %v2152 = vadd.f32 %v2038, %v2136
    %v2153 = vadd.f32 %v2043, %v2137
    %v2154 = vadd.f32 %v2048, %v2138
    %v2155 = vadd.f32 %v2053, %v2139
    %v2156 = vadd.f32 %v2058, %v2140
    %v2157 = vadd.f32 %v2063, %v2141
    %v2158 = vadd.f32 %v2068, %v2142
    %v2159 = vadd.f32 %v2073, %v2143
    %v2160 = vadd.f32 %v2078, %v2144
    %v2161 = vmul.f32 %v2145, 0.7978846
    %v2162 = vmul.f32 %v2146, 0.7978846
    %v2163 = vmul.f32 %v2147, 0.7978846
    %v2164 = vmul.f32 %v2148, 0.7978846
    %v2165 = vmul.f32 %v2149, 0.7978846
    %v2166 = vmul.f32 %v2150, 0.7978846
    %v2167 = vmul.f32 %v2151, 0.7978846
    %v2168 = vmul.f32 %v2152, 0.7978846
    %v2169 = vmul.f32 %v2153, 0.7978846
    %v2170 = vmul.f32 %v2154, 0.7978846
    %v2171 = vmul.f32 %v2155, 0.7978846
    %v2172 = vmul.f32 %v2156, 0.7978846
    %v2173 = vmul.f32 %v2157, 0.7978846
    %v2174 = vmul.f32 %v2158, 0.7978846
    %v2175 = vmul.f32 %v2159, 0.7978846
    %v2176 = vmul.f32 %v2160, 0.7978846
    %v2177 = vtanh.pop %v2161
    %v2178 = vtanh.pop %v2162
    %v2179 = vtanh.pop %v2163
    %v2180 = vtanh.pop %v2164
    %v2181 = vtanh.pop %v2165
    %v2182 = vtanh.pop %v2166
    %v2183 = vtanh.pop %v2167
    %v2184 = vtanh.pop %v2168
    %v2185 = vtanh.pop %v2169
    %v2186 = vtanh.pop %v2170
    %v2187 = vtanh.pop %v2171
    %v2188 = vtanh.pop %v2172
    %v2189 = vtanh.pop %v2173
    %v2190 = vtanh.pop %v2174
    %v2191 = vtanh.pop %v2175
    %v2192 = vtanh.pop %v2176
    %v2193 = vadd.f32 %v2177, 1.0
    %v2194 = vadd.f32 %v2178, 1.0
    %v2195 = vadd.f32 %v2179, 1.0
    %v2196 = vadd.f32 %v2180, 1.0
    %v2197 = vadd.f32 %v2181, 1.0
    %v2198 = vadd.f32 %v2182, 1.0
    %v2199 = vadd.f32 %v2183, 1.0
    %v2200 = vadd.f32 %v2184, 1.0
    %v2201 = vadd.f32 %v2185, 1.0
    %v2202 = vadd.f32 %v2186, 1.0
    %v2203 = vadd.f32 %v2187, 1.0
    %v2204 = vadd.f32 %v2188, 1.0
    %v2205 = vadd.f32 %v2189, 1.0
    %v2206 = vadd.f32 %v2190, 1.0
    %v2207 = vadd.f32 %v2191, 1.0
    %v2208 = vadd.f32 %v2192, 1.0
    %v2209 = vmul.f32 %v2081, %v2193
    %v2210 = vmul.f32 %v2082, %v2194
    %v2211 = vmul.f32 %v2083, %v2195
    %v2212 = vmul.f32 %v2084, %v2196
    %v2213 = vmul.f32 %v2085, %v2197
    %v2214 = vmul.f32 %v2086, %v2198
    %v2215 = vmul.f32 %v2087, %v2199
    %v2216 = vmul.f32 %v2088, %v2200
    %v2217 = vmul.f32 %v2089, %v2201
    %v2218 = vmul.f32 %v2090, %v2202
    %v2219 = vmul.f32 %v2091, %v2203
    %v2220 = vmul.f32 %v2092, %v2204
    %v2221 = vmul.f32 %v2093, %v2205
    %v2222 = vmul.f32 %v2094, %v2206
    %v2223 = vmul.f32 %v2095, %v2207
    %v2224 = vmul.f32 %v2096, %v2208
    %v2225 = vld [vmem:[#allocation2 + $0x1b0] sm:$0xff]
    %v2226 = vld [vmem:[#allocation2 + $0x1b8] sm:$0xff]
    %v2227 = vld [vmem:[#allocation2 + $0x1c0] sm:$0xff]
    %v2228 = vld [vmem:[#allocation2 + $0x1c8] sm:$0xff]
    %v2229 = vld [vmem:[#allocation2 + $0x1d0] sm:$0xff]
    %v2230 = vld [vmem:[#allocation2 + $0x1d8] sm:$0xff]
    %v2231 = vld [vmem:[#allocation2 + $0x1e0] sm:$0xff]
    %v2232 = vld [vmem:[#allocation2 + $0x1e8] sm:$0xff]
    %v2233 = vld [vmem:[#allocation2 + $0x1f0] sm:$0xff]
    %v2234 = vld [vmem:[#allocation2 + $0x1f8] sm:$0xff]
    %v2235 = vld [vmem:[#allocation2 + $0x200] sm:$0xff]
    %v2236 = vld [vmem:[#allocation2 + $0x208] sm:$0xff]
    %v2237 = vld [vmem:[#allocation2 + $0x210] sm:$0xff]
    %v2238 = vld [vmem:[#allocation2 + $0x218] sm:$0xff]
    %v2239 = vld [vmem:[#allocation2 + $0x220] sm:$0xff]
    %v2240 = vld [vmem:[#allocation2 + $0x228] sm:$0xff]
    %2242 = vset.pattern.permute.xlu0 0
    %2243 = vperm.xlu0 %2242, %v2233
    %v2244 = vpop.permute.xlu0 %2243
    %2247 = vset.pattern.permute.xlu0 0
    %2248 = vperm.xlu0 %2247, %v2234
    %v2249 = vpop.permute.xlu0 %2248
    %2252 = vset.pattern.permute.xlu0 0
    %2253 = vperm.xlu0 %2252, %v2235
    %v2254 = vpop.permute.xlu0 %2253
    %2257 = vset.pattern.permute.xlu0 0
    %2258 = vperm.xlu0 %2257, %v2236
    %v2259 = vpop.permute.xlu0 %2258
    %2262 = vset.pattern.permute.xlu0 0
    %2263 = vperm.xlu0 %2262, %v2237
    %v2264 = vpop.permute.xlu0 %2263
    %2267 = vset.pattern.permute.xlu0 0
    %2268 = vperm.xlu0 %2267, %v2238
    %v2269 = vpop.permute.xlu0 %2268
    %2272 = vset.pattern.permute.xlu0 0
    %2273 = vperm.xlu0 %2272, %v2239
    %v2274 = vpop.permute.xlu0 %2273
    %2277 = vset.pattern.permute.xlu0 0
    %2278 = vperm.xlu0 %2277, %v2240
    %v2279 = vpop.permute.xlu0 %2278
    %2281 = vmatprep.subr.mxu0 0.0
    %2282 = vmatpush1.msra.mxu0 %v2209
    %2283 = vmatprep.subr.mxu0 0.0
    %2284 = vmatpush1.msra.mxu0 %v2210
    %2285 = vmatprep.subr.mxu0 0.0
    %2286 = vmatpush1.msra.mxu0 %v2211
    %2287 = vmatprep.subr.mxu0 0.0
    %2288 = vmatpush1.msra.mxu0 %v2212
    %2289 = vmatprep.subr.mxu0 0.0
    %2290 = vmatpush1.msra.mxu0 %v2213
    %2291 = vmatprep.subr.mxu0 0.0
    %2292 = vmatpush1.msra.mxu0 %v2214
    %2293 = vmatprep.subr.mxu0 0.0
    %2294 = vmatpush1.msra.mxu0 %v2215
    %2295 = vmatprep.subr.mxu0 0.0
    %2296 = vmatpush1.msra.mxu0 %v2216
    %2297 = vmatprep.subr.mxu0 0.0
    %2298 = vmatpush1.msra.mxu0 %v2217
    %2299 = vmatprep.subr.mxu0 0.0
    %2300 = vmatpush1.msra.mxu0 %v2218
    %2301 = vmatprep.subr.mxu0 0.0
    %2302 = vmatpush1.msra.mxu0 %v2219
    %2303 = vmatprep.subr.mxu0 0.0
    %2304 = vmatpush1.msra.mxu0 %v2220
    %2305 = vmatprep.subr.mxu0 0.0
    %2306 = vmatpush1.msra.mxu0 %v2221
    %2307 = vmatprep.subr.mxu0 0.0
    %2308 = vmatpush1.msra.mxu0 %v2222
    %2309 = vmatprep.subr.mxu0 0.0
    %2310 = vmatpush1.msra.mxu0 %v2223
    %2311 = vmatprep.subr.mxu0 0.0
    %2312 = vmatpush1.msra.mxu0 %v2224
    %2313 = vmatprep.subr.mxu0 0.0
    %2314 = vmatpush1.msra.mxu0 0.0
    %2315 = vmatprep.subr.mxu0 0.0
    %2316 = vmatpush1.msra.mxu0 0.0
    %2317 = vmatprep.subr.mxu0 0.0
    %2318 = vmatpush1.msra.mxu0 0.0
    %2319 = vmatprep.subr.mxu0 0.0
    %2320 = vmatpush1.msra.mxu0 0.0
    %2321 = vmatprep.subr.mxu0 0.0
    %2322 = vmatpush1.msra.mxu0 0.0
    %2323 = vmatprep.subr.mxu0 0.0
    %2324 = vmatpush1.msra.mxu0 0.0
    %2325 = vmatprep.subr.mxu0 0.0
    %2326 = vmatpush1.msra.mxu0 0.0
    %2327 = vmatprep.subr.mxu0 0.0
    %2328 = vmatpush1.msra.mxu0 0.0
    %2329 = vmatprep.subr.mxu0 0.0
    %2330 = vmatpush1.msra.mxu0 0.0
    %2331 = vmatprep.subr.mxu0 0.0
    %2332 = vmatpush1.msra.mxu0 0.0
    %2333 = vmatprep.subr.mxu0 0.0
    %2334 = vmatpush1.msra.mxu0 0.0
    %2335 = vmatprep.subr.mxu0 0.0
    %2336 = vmatpush1.msra.mxu0 0.0
    %2337 = vmatprep.subr.mxu0 0.0
    %2338 = vmatpush1.msra.mxu0 0.0
    %2339 = vmatprep.subr.mxu0 0.0
    %2340 = vmatpush1.msra.mxu0 0.0
    %2341 = vmatprep.subr.mxu0 0.0
    %2342 = vmatpush1.msra.mxu0 0.0
    %2343 = vmatprep.subr.mxu0 0.0
    %2344 = vmatpush1.msra.mxu0 0.0
    %2345 = vmatprep.mubr.f32.mxu0 0.0
    %2346 = vmatmul.mubr.f32.gmra.mrb[0].mxu0 %v2225
    %v2347 = vpop.f32.mrb[0].mxu0
    %v2348 = vadd.f32 %v2244, %v2347
    %v2349 = vpop.f32.mrb[0].mxu0
    %2350 = vmatprep.mubr.f32.mxu0 0.0
    %2351 = vmatmul.mubr.f32.gmra.mrb[0].mxu0 %v2226
    %v2352 = vpop.f32.mrb[0].mxu0
    %v2353 = vadd.f32 %v2249, %v2352
    %v2354 = vpop.f32.mrb[0].mxu0
    %2355 = vmatprep.mubr.f32.mxu0 0.0
    %2356 = vmatmul.mubr.f32.gmra.mrb[0].mxu0 %v2227
    %v2357 = vpop.f32.mrb[0].mxu0
    %v2358 = vadd.f32 %v2254, %v2357
    %v2359 = vpop.f32.mrb[0].mxu0
    %2360 = vmatprep.mubr.f32.mxu0 0.0
    %2361 = vmatmul.mubr.f32.gmra.mrb[0].mxu0 %v2228
    %v2362 = vpop.f32.mrb[0].mxu0
    %v2363 = vadd.f32 %v2259, %v2362
    %v2364 = vpop.f32.mrb[0].mxu0
    %2365 = vmatprep.mubr.f32.mxu0 0.0
    %2366 = vmatmul.mubr.f32.gmra.mrb[0].mxu0 %v2229
    %v2367 = vpop.f32.mrb[0].mxu0
    %v2368 = vadd.f32 %v2264, %v2367
    %v2369 = vpop.f32.mrb[0].mxu0
    %2370 = vmatprep.mubr.f32.mxu0 0.0
    %2371 = vmatmul.mubr.f32.gmra.mrb[0].mxu0 %v2230
    %v2372 = vpop.f32.mrb[0].mxu0
    %v2373 = vadd.f32 %v2269, %v2372
    %v2374 = vpop.f32.mrb[0].mxu0
    %2375 = vmatprep.mubr.f32.mxu0 0.0
    %2376 = vmatmul.mubr.f32.gmra.mrb[0].mxu0 %v2231
    %v2377 = vpop.f32.mrb[0].mxu0
    %v2378 = vadd.f32 %v2274, %v2377
    %v2379 = vpop.f32.mrb[0].mxu0
    %2380 = vmatprep.mubr.f32.mxu0 0.0
    %2381 = vmatmul.mubr.f32.gmra.mrb[0].mxu0 %v2232
    %v2382 = vpop.f32.mrb[0].mxu0
    %v2383 = vadd.f32 %v2279, %v2382
    %v2384 = vpop.f32.mrb[0].mxu0
    %2385 = vdwg.mxu0
    %v2386 = vadd.f32 %v25, %v2348
    %v2387 = vadd.f32 %v26, %v2353
    %v2388 = vadd.f32 %v27, %v2358
    %v2389 = vadd.f32 %v28, %v2363
    %v2390 = vadd.f32 %v29, %v2368
    %v2391 = vadd.f32 %v30, %v2373
    %v2392 = vadd.f32 %v31, %v2378
    %v2393 = vadd.f32 %v32, %v2383
    %2394 = vst.msk [vmem:[%s2] sm:$0xff] %vm37, %v2386
    %2395 = vst.msk [vmem:[%s2 + $0x8] sm:$0xff] %vm37, %v2387
    %2396 = vst.msk [vmem:[%s2 + $0x10] sm:$0xff] %vm37, %v2388
    %2397 = vst.msk [vmem:[%s2 + $0x18] sm:$0xff] %vm37, %v2389
    %2398 = vst.msk [vmem:[%s2 + $0x20] sm:$0xff] %vm37, %v2390
    %2399 = vst.msk [vmem:[%s2 + $0x28] sm:$0xff] %vm37, %v2391
    %2400 = vst.msk [vmem:[%s2 + $0x30] sm:$0xff] %vm37, %v2392
    %2401 = vst.msk [vmem:[%s2 + $0x38] sm:$0xff] %vm37, %v2393
    // Predicated region
    $region14: #{forward.1} parent=1 // pred_check
      _
    $region15: #{forward.1} parent=1 // pred_check_branch
      %2403 = sbr.rel (0) target = $region17
    $region16: #{forward.1} parent=1 // pred_region
      _
    $region17: #{forward.1} parent=1 // pred_fallthru
      _
    // Predicated region
    $region18: #{forward.1} parent=1 // pred_check
      _
    $region19: #{forward.1} parent=1 // pred_check_branch
      %2405 = sbr.rel (0) target = $region21
    $region20: #{forward.1} parent=1 // pred_region
      _
    $region21: #{forward.1} parent=1 // pred_fallthru
      _
    %2406 = vsyncpa [#allocation3], 1

</llo_original>
